<compile_context>
chip_gen: v7x
topology: tpu7x:2x2x1
jax: 0.10.0
libtpu: 0.0.40
codegen_flags: <defaults>
</compile_context>

<pallas_src>
import jax
import jax.numpy as jnp
from jax import lax
from jax.experimental import pallas as pl
from jax.experimental.pallas import tpu as pltpu


def _round_up(x, m):
    return (x + m - 1) // m * m


def _make_tree_rnn_kernel(n_steps, num_layers, depth, hidden_units, group, unroll):
    L, D, H, G = num_layers, depth, hidden_units, group
    H2, H3, H4 = 2 * H, 3 * H, 4 * H
    FW = 2 * G                           # fused [child | sibling] gate width

    def kernel(gi0_ref, m_ref, init_ref, whh0_ref, wblk_ref, bias_ref,
               out_ref, state_ref):
        # Hoisted (traced-once) weight / bias loads.
        whh0 = whh0_ref[...]                                   # (H, FW)  bf16
        wblk = [wblk_ref[j] for j in range(L - 1)]             # (3H, FW) bf16
        biases = [jnp.broadcast_to(bias_ref[j], (D, FW))       # (D, FW)  f32
                  for j in range(L - 1)]

        def gru_pair(gb, h):
            # gb: (D, FW) combined gates; per-GRU group layout
            #     [ rz(2H) | gi_n(H) | gh_n(H) | pad ]
            def one(g):
                rz = jax.nn.sigmoid(g[:, :H2])
                r, z = rz[:, :H], rz[:, H:H2]
                n = jnp.tanh(g[:, H2:H3] + r * g[:, H3:H4])
                return (1.0 - z) * n + z * h
            return one(gb[:, :G]), one(gb[:, G:])

        def step(i, hs):
            # Per-depth child/sibling mask, lane-splat in-kernel (cheap).
            is_c = jnp.broadcast_to(m_ref[i], (D, H)) > 0.5    # (D, H) bool

            # Layer 0: input projection precomputed for all steps (gi0);
            # only the hidden matmul remains on the per-step critical path.
            h0 = hs[0]
            gh0 = jnp.dot(h0.astype(whh0.dtype), whh0,
                          preferred_element_type=jnp.float32)
            h_c, h_s = gru_pair(gi0_ref[i] + gh0, h0)
            new_hs = [jnp.where(is_c, h_c, h_s)]

            # Layers > 0: ONE fused block matmul per layer replaces the three
            # separate gh / gi_c / gi_s pushes (K = 3H instead of H).
            for l in range(1, L):
                h = hs[l]
                lhs = jnp.concatenate([h, h_c, h_s], axis=1).astype(whh0.dtype)
                g = jnp.dot(lhs, wblk[l - 1],
                            preferred_element_type=jnp.float32) + biases[l - 1]
                h_c, h_s = gru_pair(g, h)
                new_hs.append(jnp.where(is_c, h_c, h_s))

            out_ref[i] = jnp.where(is_c, h_c, h_s)
            return tuple(new_hs)

        final = lax.fori_loop(0, n_steps, step,
                              tuple(init_ref[l] for l in range(L)),
                              unroll=unroll)
        for l in range(L):
            state_ref[l] = final[l]

    return kernel


def tree_rnn_forward(nodes, edges, initial_state, params):
    """nodes: (T, D) int32; edges: (T, D) bool; initial_state: (L, D, H) f32.
    Returns (outputs (T, D, 1, H), final_state (L, D, H))."""
    n_steps, D = nodes.shape
    L, _, H = initial_state.shape
    U = params["emb"].shape[1]
    # Uniform (L, U, 3H) weight arrays for a multi-layer GRU require U == H
    # (layer-> 0 inputs are H-wide).
    assert U == H, "multi-layer GRU with uniform weight arrays requires U == H"

    H2, H3, H4 = 2 * H, 3 * H, 4 * H
    G = _round_up(H4, 128)        # per-GRU gate-group width, 128-lane aligned
    FW = 2 * G                    # fused [child | sibling] width
    f32, bf16 = jnp.float32, jnp.bfloat16

    # ---- wrapper-side fusion into the combined-gate layout ------------------
    def wih4(w):   # (K, 3H) input weight  -> (K, G): [rz | gi_n | 0 | pad]
        K = w.shape[0]
        return jnp.concatenate(
            [w[:, :H2], w[:, H2:H3], jnp.zeros((K, G - H3), f32)], axis=1)

    def whh4(w):   # (K, 3H) hidden weight -> (K, G): [rz | 0 | gh_n | pad]
        K = w.shape[0]
        return jnp.concatenate(
            [w[:, :H2], jnp.zeros((K, H), f32), w[:, H2:H3],
             jnp.zeros((K, G - H4), f32)], axis=1)

    def bias4(bi, bh):  # (1,3H)x2 -> (1, G): [bi_rz+bh_rz | bi_n | bh_n | pad]
        return jnp.concatenate(
            [bi[:, :H2] + bh[:, :H2], bi[:, H2:H3], bh[:, H2:H3],
             jnp.zeros((1, G - H4), f32)], axis=1)

    wih0 = jnp.concatenate([wih4(params["wih_c"][0]), wih4(params["wih_s"][0])], 1)
    whh0 = jnp.concatenate([whh4(params["whh_c"][0]), whh4(params["whh_s"][0])], 1)
    b0 = jnp.concatenate([bias4(params["bih_c"][0], params["bhh_c"][0]),
                          bias4(params["bih_s"][0], params["bhh_s"][0])], 1)

    blocks, b_rest = [], []
    for l in range(1, L):
        top = jnp.concatenate([whh4(params["whh_c"][l]), whh4(params["whh_s"][l])], 1)
        mid = jnp.concatenate([wih4(params["wih_c"][l]), jnp.zeros((H, G), f32)], 1)
        bot = jnp.concatenate([jnp.zeros((H, G), f32), wih4(params["wih_s"][l])], 1)
        blocks.append(jnp.concatenate([top, mid, bot], axis=0))         # (3H, FW)
        b_rest.append(jnp.concatenate(
            [bias4(params["bih_c"][l], params["bhh_c"][l]),
             bias4(params["bih_s"][l], params["bhh_s"][l])], 1))         # (1, FW)
    Lb = max(L - 1, 1)
    wblk = (jnp.stack(blocks) if blocks
            else jnp.zeros((1, H3, FW), f32)).astype(bf16)               # (Lb,3H,FW)
    bias = jnp.stack(b_rest) if b_rest else jnp.zeros((1, 1, FW), f32)   # (Lb,1,FW)
    whh0_bf = whh0.astype(bf16)

    # ---- hoist layer-0 input projection out of the recurrence ---------------
    emb_x = params["emb"][nodes].astype(f32)                             # (T, D, U)
    gi0 = jnp.dot(emb_x.reshape(n_steps * D, U).astype(bf16), wih0.astype(bf16),
                  preferred_element_type=jnp.float32)
    gi0 = (gi0 + b0).reshape(n_steps, D, FW)                             # f32

    mask = edges.astype(f32)[:, :, None]                                 # (T, D, 1)
    initial_state = initial_state.astype(f32)

    # ---- VMEM budget (grid=(1,) keeps everything resident) ------------------
    resident = (gi0.size * 4 + mask.size * 4 + initial_state.size * 4 +
                whh0_bf.size * 2 + wblk.size * 2 + bias.size * 4 +
                n_steps * D * H * 4 + L * D * H * 4)
    vmem_needed = 2 * resident + (2 << 20)        # 2x buffering + headroom
    assert vmem_needed < (56 << 20), (
        "resident step slab exceeds v7x VMEM budget; stream step chunks instead")
    vmem_limit = int(max(32 << 20, vmem_needed))

    unroll = True if n_steps <= 8 else 2
    kernel = _make_tree_rnn_kernel(n_steps, L, D, H, G, unroll)
    c2 = lambda i: (0, 0)
    c3 = lambda i: (0, 0, 0)

    grid_spec = pltpu.PrefetchScalarGridSpec(
        num_scalar_prefetch=0,
        grid=(1,),                                 # single resident invocation
        in_specs=[
            pl.BlockSpec((n_steps, D, FW), c3),    # precomputed layer-0 gates
            pl.BlockSpec((n_steps, D, 1), c3),     # edge mask (no H broadcast)
            pl.BlockSpec((L, D, H), c3),           # initial state
            pl.BlockSpec((H, FW), c2),             # fused layer-0 W_hh  (bf16)
            pl.BlockSpec((Lb, H3, FW), c3),        # fused block RHS, layers>0
            pl.BlockSpec((Lb, 1, FW), c3),         # fused bias, layers>0
        ],
        out_specs=[
            pl.BlockSpec((n_steps, D, H), c3),     # per-step outputs
            pl.BlockSpec((L, D, H), c3),           # final state
        ],
    )

    outs, fstate = pl.pallas_call(
        kernel,
        out_shape=(jax.ShapeDtypeStruct((n_steps, D, H), jnp.float32),
                   jax.ShapeDtypeStruct((L, D, H), jnp.float32)),
        grid_spec=grid_spec,
        input_output_aliases={2: 1},               # initial_state -> final state
        compiler_params=pltpu.CompilerParams(
            dimension_semantics=("arbitrary",),     # serial recurrence
            vmem_limit_bytes=vmem_limit),
    )(gi0, mask, initial_state, whh0_bf, wblk, bias)

    return outs[:, :, None, :], fstate


def ref_forward(nodes, edges, initial_state, params):
    """Pure-JAX f32 reference mirroring the PyTorch forward."""
    emb_x = params["emb"][nodes].astype(jnp.float32)
    L, D, H = initial_state.shape
    state = initial_state
    outs = []

    def run(prefix, x, state):
        inp = x
        sts = []
        for l in range(L):
            h = state[l]
            gi = inp @ params["wih_" + prefix][l] + params["bih_" + prefix][l][0]
            gh = h @ params["whh_" + prefix][l] + params["bhh_" + prefix][l][0]
            r = jax.nn.sigmoid(gi[:, :H] + gh[:, :H])
            z = jax.nn.sigmoid(gi[:, H:2 * H] + gh[:, H:2 * H])
            n = jnp.tanh(gi[:, 2 * H:] + r * gh[:, 2 * H:])
            h_new = (1.0 - z) * n + z * h
            sts.append(h_new)
            inp = h_new
        return inp, jnp.stack(sts)

    for i in range(nodes.shape[0]):
        mask = edges[i][:, None]
        oc, sc = run("c", emb_x[i], state)
        os_, ss = run("s", emb_x[i], state)
        outs.append(jnp.where(mask, oc, os_))
        state = jnp.where(mask[None], sc, ss)
    return jnp.stack(outs)[:, :, None, :], state


def init_params(key, vocab, units, hidden, num_layers):
    k = 1.0 / jnp.sqrt(hidden)
    keys = jax.random.split(key, 9)
    uni = lambda kk, shape: jax.random.uniform(kk, shape, jnp.float32, -k, k)
    return {
        "emb": jax.random.normal(keys[0], (vocab, units), jnp.float32),
        # child GRU (pre-transposed: (L, in, 3H)), gate order [r, z, n]
        "wih_c": uni(keys[1], (num_layers, units, 3 * hidden)),
        "whh_c": uni(keys[2], (num_layers, hidden, 3 * hidden)),
        "bih_c": uni(keys[3], (num_layers, 1, 3 * hidden)),
        "bhh_c": uni(keys[4], (num_layers, 1, 3 * hidden)),
        # sibling GRU
        "wih_s": uni(keys[5], (num_layers, units, 3 * hidden)),
        "whh_s": uni(keys[6], (num_layers, hidden, 3 * hidden)),
        "bih_s": uni(keys[7], (num_layers, 1, 3 * hidden)),
        "bhh_s": uni(keys[8], (num_layers, 1, 3 * hidden)),
    }


if __name__ == "__main__":
    # Small shapes consistent with the module: batch_size == max_ast_depth == 8,
    # input_dim == units == hidden_units == 32, num_layers == 2, 4 node steps.
    VOCAB, D, U, H, L, N_STEPS = 16, 8, 32, 32, 2, 4

    key = jax.random.PRNGKey(0)
    kp, kn, ke, ks = jax.random.split(key, 4)

    params = init_params(kp, VOCAB, U, H, L)
    nodes = jax.random.randint(kn, (N_STEPS, D), 0, VOCAB, dtype=jnp.int32)
    edges = jax.random.bernoulli(ke, 0.5, (N_STEPS, D))
    initial_state = jax.random.normal(ks, (L, D, H), jnp.float32)

    outputs, final_state = tree_rnn_forward(nodes, edges, initial_state, params)
    outputs = jax.block_until_ready(outputs)
    final_state = jax.block_until_ready(final_state)

    ref_out, ref_state = ref_forward(nodes, edges, initial_state, params)

    assert outputs.shape == (N_STEPS, D, 1, H)
    assert final_state.shape == (L, D, H)
    # bf16 MXU operands vs an all-f32 reference -> loosened tolerance.
    assert jnp.allclose(outputs, ref_out, atol=3e-2, rtol=3e-2)
    assert jnp.allclose(final_state, ref_state, atol=3e-2, rtol=3e-2)

    print("KERNEL_OK")
</pallas_src>

<mosaic_0001>
module attributes {stable_mosaic.version = 11 : i64} {
  func.func @kernel(%arg0: i32, %arg1: memref<4x8x256xf32, #tpu.memory_space<vmem>>, %arg2: memref<4x8x1xf32, #tpu.memory_space<vmem>>, %arg3: memref<2x8x32xf32, #tpu.memory_space<vmem>>, %arg4: memref<32x256xbf16, #tpu.memory_space<vmem>>, %arg5: memref<1x96x256xbf16, #tpu.memory_space<vmem>>, %arg6: memref<1x1x256xf32, #tpu.memory_space<vmem>>, %arg7: memref<4x8x32xf32, #tpu.memory_space<vmem>>, %arg8: memref<2x8x32xf32, #tpu.memory_space<vmem>>) attributes {dimension_semantics = [#tpu.dimension_semantics<arbitrary>], iteration_bounds = array<i64: 1>, scalar_prefetch = 0 : i64, scratch_operands = 0 : i64, tpu.core_type = #tpu.core_type<tc>, window_params = [{pipeline_mode = #tpu.pipeline_mode<synchronous>, transform_indices = @transform_0, window_bounds = array<i64: 4, 8, 256>}, {pipeline_mode = #tpu.pipeline_mode<synchronous>, transform_indices = @transform_1, window_bounds = array<i64: 4, 8, 1>}, {pipeline_mode = #tpu.pipeline_mode<synchronous>, transform_indices = @transform_2, window_bounds = array<i64: 2, 8, 32>}, {pipeline_mode = #tpu.pipeline_mode<synchronous>, transform_indices = @transform_3, window_bounds = array<i64: 32, 256>}, {pipeline_mode = #tpu.pipeline_mode<synchronous>, transform_indices = @transform_4, window_bounds = array<i64: 1, 96, 256>}, {pipeline_mode = #tpu.pipeline_mode<synchronous>, transform_indices = @transform_5, window_bounds = array<i64: 1, 1, 256>}, {pipeline_mode = #tpu.pipeline_mode<synchronous>, transform_indices = @transform_6, window_bounds = array<i64: 4, 8, 32>}, {pipeline_mode = #tpu.pipeline_mode<synchronous>, transform_indices = @transform_7, window_bounds = array<i64: 2, 8, 32>}]} {
    %c0 = arith.constant 0 : index
    %c0_0 = arith.constant 0 : index
    %0 = vector.load %arg4[%c0, %c0_0] : memref<32x256xbf16, #tpu.memory_space<vmem>>, vector<32x256xbf16>
    %c0_1 = arith.constant 0 : index
    %c0_2 = arith.constant 0 : index
    %c0_3 = arith.constant 0 : index
    %1 = vector.load %arg5[%c0_1, %c0_2, %c0_3] : memref<1x96x256xbf16, #tpu.memory_space<vmem>>, vector<1x96x256xbf16>
    %2 = vector.shape_cast %1 : vector<1x96x256xbf16> to vector<96x256xbf16>
    %c0_4 = arith.constant 0 : index
    %c0_5 = arith.constant 0 : index
    %c0_6 = arith.constant 0 : index
    %3 = vector.load %arg6[%c0_4, %c0_5, %c0_6] : memref<1x1x256xf32, #tpu.memory_space<vmem>>, vector<1x1x256xf32>
    %4 = vector.shape_cast %3 : vector<1x1x256xf32> to vector<1x256xf32>
    %5 = vector.shape_cast %4 : vector<1x256xf32> to vector<1x256xf32>
    %6 = vector.broadcast %5 : vector<1x256xf32> to vector<8x256xf32>
    %c0_7 = arith.constant 0 : index
    %c0_8 = arith.constant 0 : index
    %c0_9 = arith.constant 0 : index
    %7 = vector.load %arg3[%c0_7, %c0_8, %c0_9] : memref<2x8x32xf32, #tpu.memory_space<vmem>>, vector<1x8x32xf32>
    %8 = vector.shape_cast %7 : vector<1x8x32xf32> to vector<8x32xf32>
    %c1 = arith.constant 1 : index
    %c0_10 = arith.constant 0 : index
    %c0_11 = arith.constant 0 : index
    %9 = vector.load %arg3[%c1, %c0_10, %c0_11] : memref<2x8x32xf32, #tpu.memory_space<vmem>>, vector<1x8x32xf32>
    %10 = vector.shape_cast %9 : vector<1x8x32xf32> to vector<8x32xf32>
    %c0_i32 = arith.constant 0 : i32
    %11 = arith.index_cast %c0_i32 : i32 to index
    %c0_12 = arith.constant 0 : index
    %c0_13 = arith.constant 0 : index
    %12 = vector.load %arg2[%11, %c0_12, %c0_13] : memref<4x8x1xf32, #tpu.memory_space<vmem>>, vector<1x8x1xf32>
    %13 = vector.shape_cast %12 : vector<1x8x1xf32> to vector<8x1xf32>
    %14 = vector.shape_cast %13 : vector<8x1xf32> to vector<8x1xf32>
    %15 = vector.broadcast %14 : vector<8x1xf32> to vector<8x32xf32>
    %cst = arith.constant 5.000000e-01 : f32
    %16 = vector.broadcast %cst : f32 to vector<8x32xf32>
    %17 = arith.cmpf ogt, %15, %16 : vector<8x32xf32>
    %18 = arith.truncf %8 : vector<8x32xf32> to vector<8x32xbf16>
    %cst_14 = arith.constant dense<0.000000e+00> : vector<8x256xf32>
    %19 = tpu.matmul %18, %0, %cst_14 {dimension_numbers = #tpu.dot_dimension_numbers<[1], [0], [0], [1], [0, 0, 1, 1], [], []>} : vector<8x32xbf16>, vector<32x256xbf16>, vector<8x256xf32> -> vector<8x256xf32>
    %20 = arith.index_cast %c0_i32 : i32 to index
    %c0_15 = arith.constant 0 : index
    %c0_16 = arith.constant 0 : index
    %21 = vector.load %arg1[%20, %c0_15, %c0_16] : memref<4x8x256xf32, #tpu.memory_space<vmem>>, vector<1x8x256xf32>
    %22 = vector.shape_cast %21 : vector<1x8x256xf32> to vector<8x256xf32>
    %23 = arith.addf %22, %19 : vector<8x256xf32>
    %24 = vector.extract_strided_slice %23 {offsets = [0, 0], sizes = [8, 128], strides = [1, 1]} : vector<8x256xf32> to vector<8x128xf32>
    %25 = vector.extract_strided_slice %24 {offsets = [0, 0], sizes = [8, 64], strides = [1, 1]} : vector<8x128xf32> to vector<8x64xf32>
    %26 = arith.negf %25 : vector<8x64xf32>
    %27 = math.exp %26 : vector<8x64xf32>
    %cst_17 = arith.constant 1.000000e+00 : f32
    %28 = vector.broadcast %cst_17 : f32 to vector<8x64xf32>
    %29 = arith.addf %28, %27 : vector<8x64xf32>
    %30 = arith.divf %28, %29 : vector<8x64xf32>
    %31 = vector.extract_strided_slice %30 {offsets = [0, 0], sizes = [8, 32], strides = [1, 1]} : vector<8x64xf32> to vector<8x32xf32>
    %32 = vector.extract_strided_slice %30 {offsets = [0, 32], sizes = [8, 32], strides = [1, 1]} : vector<8x64xf32> to vector<8x32xf32>
    %33 = vector.extract_strided_slice %24 {offsets = [0, 64], sizes = [8, 32], strides = [1, 1]} : vector<8x128xf32> to vector<8x32xf32>
    %34 = vector.extract_strided_slice %24 {offsets = [0, 96], sizes = [8, 32], strides = [1, 1]} : vector<8x128xf32> to vector<8x32xf32>
    %35 = arith.mulf %31, %34 : vector<8x32xf32>
    %36 = arith.addf %33, %35 : vector<8x32xf32>
    %37 = math.tanh %36 : vector<8x32xf32>
    %cst_18 = arith.constant 1.000000e+00 : f32
    %38 = vector.broadcast %cst_18 : f32 to vector<8x32xf32>
    %39 = arith.subf %38, %32 : vector<8x32xf32>
    %40 = arith.mulf %39, %37 : vector<8x32xf32>
    %41 = arith.mulf %32, %8 : vector<8x32xf32>
    %42 = arith.addf %40, %41 : vector<8x32xf32>
    %43 = vector.extract_strided_slice %23 {offsets = [0, 128], sizes = [8, 128], strides = [1, 1]} : vector<8x256xf32> to vector<8x128xf32>
    %44 = vector.extract_strided_slice %43 {offsets = [0, 0], sizes = [8, 64], strides = [1, 1]} : vector<8x128xf32> to vector<8x64xf32>
    %45 = arith.negf %44 : vector<8x64xf32>
    %46 = math.exp %45 : vector<8x64xf32>
    %cst_19 = arith.constant 1.000000e+00 : f32
    %47 = vector.broadcast %cst_19 : f32 to vector<8x64xf32>
    %48 = arith.addf %47, %46 : vector<8x64xf32>
    %49 = arith.divf %47, %48 : vector<8x64xf32>
    %50 = vector.extract_strided_slice %49 {offsets = [0, 0], sizes = [8, 32], strides = [1, 1]} : vector<8x64xf32> to vector<8x32xf32>
    %51 = vector.extract_strided_slice %49 {offsets = [0, 32], sizes = [8, 32], strides = [1, 1]} : vector<8x64xf32> to vector<8x32xf32>
    %52 = vector.extract_strided_slice %43 {offsets = [0, 64], sizes = [8, 32], strides = [1, 1]} : vector<8x128xf32> to vector<8x32xf32>
    %53 = vector.extract_strided_slice %43 {offsets = [0, 96], sizes = [8, 32], strides = [1, 1]} : vector<8x128xf32> to vector<8x32xf32>
    %54 = arith.mulf %50, %53 : vector<8x32xf32>
    %55 = arith.addf %52, %54 : vector<8x32xf32>
    %56 = math.tanh %55 : vector<8x32xf32>
    %cst_20 = arith.constant 1.000000e+00 : f32
    %57 = vector.broadcast %cst_20 : f32 to vector<8x32xf32>
    %58 = arith.subf %57, %51 : vector<8x32xf32>
    %59 = arith.mulf %58, %56 : vector<8x32xf32>
    %60 = arith.mulf %51, %8 : vector<8x32xf32>
    %61 = arith.addf %59, %60 : vector<8x32xf32>
    %62 = arith.select %17, %42, %61 : vector<8x32xi1>, vector<8x32xf32>
    %63 = tpu.concatenate %10, %42, %61 in 1 : vector<8x32xf32>, vector<8x32xf32>, vector<8x32xf32> -> vector<8x96xf32>
    %64 = arith.truncf %63 : vector<8x96xf32> to vector<8x96xbf16>
    %cst_21 = arith.constant dense<0.000000e+00> : vector<8x256xf32>
    %65 = tpu.matmul %64, %2, %cst_21 {dimension_numbers = #tpu.dot_dimension_numbers<[1], [0], [0], [1], [0, 0, 1, 1], [], []>} : vector<8x96xbf16>, vector<96x256xbf16>, vector<8x256xf32> -> vector<8x256xf32>
    %66 = arith.addf %65, %6 : vector<8x256xf32>
    %67 = vector.extract_strided_slice %66 {offsets = [0, 0], sizes = [8, 128], strides = [1, 1]} : vector<8x256xf32> to vector<8x128xf32>
    %68 = vector.extract_strided_slice %67 {offsets = [0, 0], sizes = [8, 64], strides = [1, 1]} : vector<8x128xf32> to vector<8x64xf32>
    %69 = arith.negf %68 : vector<8x64xf32>
    %70 = math.exp %69 : vector<8x64xf32>
    %cst_22 = arith.constant 1.000000e+00 : f32
    %71 = vector.broadcast %cst_22 : f32 to vector<8x64xf32>
    %72 = arith.addf %71, %70 : vector<8x64xf32>
    %73 = arith.divf %71, %72 : vector<8x64xf32>
    %74 = vector.extract_strided_slice %73 {offsets = [0, 0], sizes = [8, 32], strides = [1, 1]} : vector<8x64xf32> to vector<8x32xf32>
    %75 = vector.extract_strided_slice %73 {offsets = [0, 32], sizes = [8, 32], strides = [1, 1]} : vector<8x64xf32> to vector<8x32xf32>
    %76 = vector.extract_strided_slice %67 {offsets = [0, 64], sizes = [8, 32], strides = [1, 1]} : vector<8x128xf32> to vector<8x32xf32>
    %77 = vector.extract_strided_slice %67 {offsets = [0, 96], sizes = [8, 32], strides = [1, 1]} : vector<8x128xf32> to vector<8x32xf32>
    %78 = arith.mulf %74, %77 : vector<8x32xf32>
    %79 = arith.addf %76, %78 : vector<8x32xf32>
    %80 = math.tanh %79 : vector<8x32xf32>
    %cst_23 = arith.constant 1.000000e+00 : f32
    %81 = vector.broadcast %cst_23 : f32 to vector<8x32xf32>
    %82 = arith.subf %81, %75 : vector<8x32xf32>
    %83 = arith.mulf %82, %80 : vector<8x32xf32>
    %84 = arith.mulf %75, %10 : vector<8x32xf32>
    %85 = arith.addf %83, %84 : vector<8x32xf32>
    %86 = vector.extract_strided_slice %66 {offsets = [0, 128], sizes = [8, 128], strides = [1, 1]} : vector<8x256xf32> to vector<8x128xf32>
    %87 = vector.extract_strided_slice %86 {offsets = [0, 0], sizes = [8, 64], strides = [1, 1]} : vector<8x128xf32> to vector<8x64xf32>
    %88 = arith.negf %87 : vector<8x64xf32>
    %89 = math.exp %88 : vector<8x64xf32>
    %cst_24 = arith.constant 1.000000e+00 : f32
    %90 = vector.broadcast %cst_24 : f32 to vector<8x64xf32>
    %91 = arith.addf %90, %89 : vector<8x64xf32>
    %92 = arith.divf %90, %91 : vector<8x64xf32>
    %93 = vector.extract_strided_slice %92 {offsets = [0, 0], sizes = [8, 32], strides = [1, 1]} : vector<8x64xf32> to vector<8x32xf32>
    %94 = vector.extract_strided_slice %92 {offsets = [0, 32], sizes = [8, 32], strides = [1, 1]} : vector<8x64xf32> to vector<8x32xf32>
    %95 = vector.extract_strided_slice %86 {offsets = [0, 64], sizes = [8, 32], strides = [1, 1]} : vector<8x128xf32> to vector<8x32xf32>
    %96 = vector.extract_strided_slice %86 {offsets = [0, 96], sizes = [8, 32], strides = [1, 1]} : vector<8x128xf32> to vector<8x32xf32>
    %97 = arith.mulf %93, %96 : vector<8x32xf32>
    %98 = arith.addf %95, %97 : vector<8x32xf32>
    %99 = math.tanh %98 : vector<8x32xf32>
    %cst_25 = arith.constant 1.000000e+00 : f32
    %100 = vector.broadcast %cst_25 : f32 to vector<8x32xf32>
    %101 = arith.subf %100, %94 : vector<8x32xf32>
    %102 = arith.mulf %101, %99 : vector<8x32xf32>
    %103 = arith.mulf %94, %10 : vector<8x32xf32>
    %104 = arith.addf %102, %103 : vector<8x32xf32>
    %105 = arith.select %17, %85, %104 : vector<8x32xi1>, vector<8x32xf32>
    %106 = arith.select %17, %85, %104 : vector<8x32xi1>, vector<8x32xf32>
    %107 = arith.index_cast %c0_i32 : i32 to index
    %c0_26 = arith.constant 0 : index
    %c0_27 = arith.constant 0 : index
    %108 = vector.load %arg7[%107, %c0_26, %c0_27] : memref<4x8x32xf32, #tpu.memory_space<vmem>>, vector<1x8x32xf32>
    %109 = vector.shape_cast %108 : vector<1x8x32xf32> to vector<8x32xf32>
    %110 = vector.shape_cast %106 : vector<8x32xf32> to vector<1x8x32xf32>
    tpu.vector_store %arg7[%107, %c0_26, %c0_27], %110 {strides = array<i32>} : memref<4x8x32xf32, #tpu.memory_space<vmem>>, vector<1x8x32xf32>,
    %c1_i32 = arith.constant 1 : i32
    %111 = arith.index_cast %c1_i32 : i32 to index
    %c0_28 = arith.constant 0 : index
    %c0_29 = arith.constant 0 : index
    %112 = vector.load %arg2[%111, %c0_28, %c0_29] : memref<4x8x1xf32, #tpu.memory_space<vmem>>, vector<1x8x1xf32>
    %113 = vector.shape_cast %112 : vector<1x8x1xf32> to vector<8x1xf32>
    %114 = vector.shape_cast %113 : vector<8x1xf32> to vector<8x1xf32>
    %115 = vector.broadcast %114 : vector<8x1xf32> to vector<8x32xf32>
    %cst_30 = arith.constant 5.000000e-01 : f32
    %116 = vector.broadcast %cst_30 : f32 to vector<8x32xf32>
    %117 = arith.cmpf ogt, %115, %116 : vector<8x32xf32>
    %118 = arith.truncf %62 : vector<8x32xf32> to vector<8x32xbf16>
    %cst_31 = arith.constant dense<0.000000e+00> : vector<8x256xf32>
    %119 = tpu.matmul %118, %0, %cst_31 {dimension_numbers = #tpu.dot_dimension_numbers<[1], [0], [0], [1], [0, 0, 1, 1], [], []>} : vector<8x32xbf16>, vector<32x256xbf16>, vector<8x256xf32> -> vector<8x256xf32>
    %120 = arith.index_cast %c1_i32 : i32 to index
    %c0_32 = arith.constant 0 : index
    %c0_33 = arith.constant 0 : index
    %121 = vector.load %arg1[%120, %c0_32, %c0_33] : memref<4x8x256xf32, #tpu.memory_space<vmem>>, vector<1x8x256xf32>
    %122 = vector.shape_cast %121 : vector<1x8x256xf32> to vector<8x256xf32>
    %123 = arith.addf %122, %119 : vector<8x256xf32>
    %124 = vector.extract_strided_slice %123 {offsets = [0, 0], sizes = [8, 128], strides = [1, 1]} : vector<8x256xf32> to vector<8x128xf32>
    %125 = vector.extract_strided_slice %124 {offsets = [0, 0], sizes = [8, 64], strides = [1, 1]} : vector<8x128xf32> to vector<8x64xf32>
    %126 = arith.negf %125 : vector<8x64xf32>
    %127 = math.exp %126 : vector<8x64xf32>
    %cst_34 = arith.constant 1.000000e+00 : f32
    %128 = vector.broadcast %cst_34 : f32 to vector<8x64xf32>
    %129 = arith.addf %128, %127 : vector<8x64xf32>
    %130 = arith.divf %128, %129 : vector<8x64xf32>
    %131 = vector.extract_strided_slice %130 {offsets = [0, 0], sizes = [8, 32], strides = [1, 1]} : vector<8x64xf32> to vector<8x32xf32>
    %132 = vector.extract_strided_slice %130 {offsets = [0, 32], sizes = [8, 32], strides = [1, 1]} : vector<8x64xf32> to vector<8x32xf32>
    %133 = vector.extract_strided_slice %124 {offsets = [0, 64], sizes = [8, 32], strides = [1, 1]} : vector<8x128xf32> to vector<8x32xf32>
    %134 = vector.extract_strided_slice %124 {offsets = [0, 96], sizes = [8, 32], strides = [1, 1]} : vector<8x128xf32> to vector<8x32xf32>
    %135 = arith.mulf %131, %134 : vector<8x32xf32>
    %136 = arith.addf %133, %135 : vector<8x32xf32>
    %137 = math.tanh %136 : vector<8x32xf32>
    %cst_35 = arith.constant 1.000000e+00 : f32
    %138 = vector.broadcast %cst_35 : f32 to vector<8x32xf32>
    %139 = arith.subf %138, %132 : vector<8x32xf32>
    %140 = arith.mulf %139, %137 : vector<8x32xf32>
    %141 = arith.mulf %132, %62 : vector<8x32xf32>
    %142 = arith.addf %140, %141 : vector<8x32xf32>
    %143 = vector.extract_strided_slice %123 {offsets = [0, 128], sizes = [8, 128], strides = [1, 1]} : vector<8x256xf32> to vector<8x128xf32>
    %144 = vector.extract_strided_slice %143 {offsets = [0, 0], sizes = [8, 64], strides = [1, 1]} : vector<8x128xf32> to vector<8x64xf32>
    %145 = arith.negf %144 : vector<8x64xf32>
    %146 = math.exp %145 : vector<8x64xf32>
    %cst_36 = arith.constant 1.000000e+00 : f32
    %147 = vector.broadcast %cst_36 : f32 to vector<8x64xf32>
    %148 = arith.addf %147, %146 : vector<8x64xf32>
    %149 = arith.divf %147, %148 : vector<8x64xf32>
    %150 = vector.extract_strided_slice %149 {offsets = [0, 0], sizes = [8, 32], strides = [1, 1]} : vector<8x64xf32> to vector<8x32xf32>
    %151 = vector.extract_strided_slice %149 {offsets = [0, 32], sizes = [8, 32], strides = [1, 1]} : vector<8x64xf32> to vector<8x32xf32>
    %152 = vector.extract_strided_slice %143 {offsets = [0, 64], sizes = [8, 32], strides = [1, 1]} : vector<8x128xf32> to vector<8x32xf32>
    %153 = vector.extract_strided_slice %143 {offsets = [0, 96], sizes = [8, 32], strides = [1, 1]} : vector<8x128xf32> to vector<8x32xf32>
    %154 = arith.mulf %150, %153 : vector<8x32xf32>
    %155 = arith.addf %152, %154 : vector<8x32xf32>
    %156 = math.tanh %155 : vector<8x32xf32>
    %cst_37 = arith.constant 1.000000e+00 : f32
    %157 = vector.broadcast %cst_37 : f32 to vector<8x32xf32>
    %158 = arith.subf %157, %151 : vector<8x32xf32>
    %159 = arith.mulf %158, %156 : vector<8x32xf32>
    %160 = arith.mulf %151, %62 : vector<8x32xf32>
    %161 = arith.addf %159, %160 : vector<8x32xf32>
    %162 = arith.select %117, %142, %161 : vector<8x32xi1>, vector<8x32xf32>
    %163 = tpu.concatenate %105, %142, %161 in 1 : vector<8x32xf32>, vector<8x32xf32>, vector<8x32xf32> -> vector<8x96xf32>
    %164 = arith.truncf %163 : vector<8x96xf32> to vector<8x96xbf16>
    %cst_38 = arith.constant dense<0.000000e+00> : vector<8x256xf32>
    %165 = tpu.matmul %164, %2, %cst_38 {dimension_numbers = #tpu.dot_dimension_numbers<[1], [0], [0], [1], [0, 0, 1, 1], [], []>} : vector<8x96xbf16>, vector<96x256xbf16>, vector<8x256xf32> -> vector<8x256xf32>
    %166 = arith.addf %165, %6 : vector<8x256xf32>
    %167 = vector.extract_strided_slice %166 {offsets = [0, 0], sizes = [8, 128], strides = [1, 1]} : vector<8x256xf32> to vector<8x128xf32>
    %168 = vector.extract_strided_slice %167 {offsets = [0, 0], sizes = [8, 64], strides = [1, 1]} : vector<8x128xf32> to vector<8x64xf32>
    %169 = arith.negf %168 : vector<8x64xf32>
    %170 = math.exp %169 : vector<8x64xf32>
    %cst_39 = arith.constant 1.000000e+00 : f32
    %171 = vector.broadcast %cst_39 : f32 to vector<8x64xf32>
    %172 = arith.addf %171, %170 : vector<8x64xf32>
    %173 = arith.divf %171, %172 : vector<8x64xf32>
    %174 = vector.extract_strided_slice %173 {offsets = [0, 0], sizes = [8, 32], strides = [1, 1]} : vector<8x64xf32> to vector<8x32xf32>
    %175 = vector.extract_strided_slice %173 {offsets = [0, 32], sizes = [8, 32], strides = [1, 1]} : vector<8x64xf32> to vector<8x32xf32>
    %176 = vector.extract_strided_slice %167 {offsets = [0, 64], sizes = [8, 32], strides = [1, 1]} : vector<8x128xf32> to vector<8x32xf32>
    %177 = vector.extract_strided_slice %167 {offsets = [0, 96], sizes = [8, 32], strides = [1, 1]} : vector<8x128xf32> to vector<8x32xf32>
    %178 = arith.mulf %174, %177 : vector<8x32xf32>
    %179 = arith.addf %176, %178 : vector<8x32xf32>
    %180 = math.tanh %179 : vector<8x32xf32>
    %cst_40 = arith.constant 1.000000e+00 : f32
    %181 = vector.broadcast %cst_40 : f32 to vector<8x32xf32>
    %182 = arith.subf %181, %175 : vector<8x32xf32>
    %183 = arith.mulf %182, %180 : vector<8x32xf32>
    %184 = arith.mulf %175, %105 : vector<8x32xf32>
    %185 = arith.addf %183, %184 : vector<8x32xf32>
    %186 = vector.extract_strided_slice %166 {offsets = [0, 128], sizes = [8, 128], strides = [1, 1]} : vector<8x256xf32> to vector<8x128xf32>
    %187 = vector.extract_strided_slice %186 {offsets = [0, 0], sizes = [8, 64], strides = [1, 1]} : vector<8x128xf32> to vector<8x64xf32>
    %188 = arith.negf %187 : vector<8x64xf32>
    %189 = math.exp %188 : vector<8x64xf32>
    %cst_41 = arith.constant 1.000000e+00 : f32
    %190 = vector.broadcast %cst_41 : f32 to vector<8x64xf32>
    %191 = arith.addf %190, %189 : vector<8x64xf32>
    %192 = arith.divf %190, %191 : vector<8x64xf32>
    %193 = vector.extract_strided_slice %192 {offsets = [0, 0], sizes = [8, 32], strides = [1, 1]} : vector<8x64xf32> to vector<8x32xf32>
    %194 = vector.extract_strided_slice %192 {offsets = [0, 32], sizes = [8, 32], strides = [1, 1]} : vector<8x64xf32> to vector<8x32xf32>
    %195 = vector.extract_strided_slice %186 {offsets = [0, 64], sizes = [8, 32], strides = [1, 1]} : vector<8x128xf32> to vector<8x32xf32>
    %196 = vector.extract_strided_slice %186 {offsets = [0, 96], sizes = [8, 32], strides = [1, 1]} : vector<8x128xf32> to vector<8x32xf32>
    %197 = arith.mulf %193, %196 : vector<8x32xf32>
    %198 = arith.addf %195, %197 : vector<8x32xf32>
    %199 = math.tanh %198 : vector<8x32xf32>
    %cst_42 = arith.constant 1.000000e+00 : f32
    %200 = vector.broadcast %cst_42 : f32 to vector<8x32xf32>
    %201 = arith.subf %200, %194 : vector<8x32xf32>
    %202 = arith.mulf %201, %199 : vector<8x32xf32>
    %203 = arith.mulf %194, %105 : vector<8x32xf32>
    %204 = arith.addf %202, %203 : vector<8x32xf32>
    %205 = arith.select %117, %185, %204 : vector<8x32xi1>, vector<8x32xf32>
    %206 = arith.select %117, %185, %204 : vector<8x32xi1>, vector<8x32xf32>
    %207 = arith.index_cast %c1_i32 : i32 to index
    %c0_43 = arith.constant 0 : index
    %c0_44 = arith.constant 0 : index
    %208 = vector.load %arg7[%207, %c0_43, %c0_44] : memref<4x8x32xf32, #tpu.memory_space<vmem>>, vector<1x8x32xf32>
    %209 = vector.shape_cast %208 : vector<1x8x32xf32> to vector<8x32xf32>
    %210 = vector.shape_cast %206 : vector<8x32xf32> to vector<1x8x32xf32>
    tpu.vector_store %arg7[%207, %c0_43, %c0_44], %210 {strides = array<i32>} : memref<4x8x32xf32, #tpu.memory_space<vmem>>, vector<1x8x32xf32>,
    %c2_i32 = arith.constant 2 : i32
    %211 = arith.index_cast %c2_i32 : i32 to index
    %c0_45 = arith.constant 0 : index
    %c0_46 = arith.constant 0 : index
    %212 = vector.load %arg2[%211, %c0_45, %c0_46] : memref<4x8x1xf32, #tpu.memory_space<vmem>>, vector<1x8x1xf32>
    %213 = vector.shape_cast %212 : vector<1x8x1xf32> to vector<8x1xf32>
    %214 = vector.shape_cast %213 : vector<8x1xf32> to vector<8x1xf32>
    %215 = vector.broadcast %214 : vector<8x1xf32> to vector<8x32xf32>
    %cst_47 = arith.constant 5.000000e-01 : f32
    %216 = vector.broadcast %cst_47 : f32 to vector<8x32xf32>
    %217 = arith.cmpf ogt, %215, %216 : vector<8x32xf32>
    %218 = arith.truncf %162 : vector<8x32xf32> to vector<8x32xbf16>
    %cst_48 = arith.constant dense<0.000000e+00> : vector<8x256xf32>
    %219 = tpu.matmul %218, %0, %cst_48 {dimension_numbers = #tpu.dot_dimension_numbers<[1], [0], [0], [1], [0, 0, 1, 1], [], []>} : vector<8x32xbf16>, vector<32x256xbf16>, vector<8x256xf32> -> vector<8x256xf32>
    %220 = arith.index_cast %c2_i32 : i32 to index
    %c0_49 = arith.constant 0 : index
    %c0_50 = arith.constant 0 : index
    %221 = vector.load %arg1[%220, %c0_49, %c0_50] : memref<4x8x256xf32, #tpu.memory_space<vmem>>, vector<1x8x256xf32>
    %222 = vector.shape_cast %221 : vector<1x8x256xf32> to vector<8x256xf32>
    %223 = arith.addf %222, %219 : vector<8x256xf32>
    %224 = vector.extract_strided_slice %223 {offsets = [0, 0], sizes = [8, 128], strides = [1, 1]} : vector<8x256xf32> to vector<8x128xf32>
    %225 = vector.extract_strided_slice %224 {offsets = [0, 0], sizes = [8, 64], strides = [1, 1]} : vector<8x128xf32> to vector<8x64xf32>
    %226 = arith.negf %225 : vector<8x64xf32>
    %227 = math.exp %226 : vector<8x64xf32>
    %cst_51 = arith.constant 1.000000e+00 : f32
    %228 = vector.broadcast %cst_51 : f32 to vector<8x64xf32>
    %229 = arith.addf %228, %227 : vector<8x64xf32>
    %230 = arith.divf %228, %229 : vector<8x64xf32>
    %231 = vector.extract_strided_slice %230 {offsets = [0, 0], sizes = [8, 32], strides = [1, 1]} : vector<8x64xf32> to vector<8x32xf32>
    %232 = vector.extract_strided_slice %230 {offsets = [0, 32], sizes = [8, 32], strides = [1, 1]} : vector<8x64xf32> to vector<8x32xf32>
    %233 = vector.extract_strided_slice %224 {offsets = [0, 64], sizes = [8, 32], strides = [1, 1]} : vector<8x128xf32> to vector<8x32xf32>
    %234 = vector.extract_strided_slice %224 {offsets = [0, 96], sizes = [8, 32], strides = [1, 1]} : vector<8x128xf32> to vector<8x32xf32>
    %235 = arith.mulf %231, %234 : vector<8x32xf32>
    %236 = arith.addf %233, %235 : vector<8x32xf32>
    %237 = math.tanh %236 : vector<8x32xf32>
    %cst_52 = arith.constant 1.000000e+00 : f32
    %238 = vector.broadcast %cst_52 : f32 to vector<8x32xf32>
    %239 = arith.subf %238, %232 : vector<8x32xf32>
    %240 = arith.mulf %239, %237 : vector<8x32xf32>
    %241 = arith.mulf %232, %162 : vector<8x32xf32>
    %242 = arith.addf %240, %241 : vector<8x32xf32>
    %243 = vector.extract_strided_slice %223 {offsets = [0, 128], sizes = [8, 128], strides = [1, 1]} : vector<8x256xf32> to vector<8x128xf32>
    %244 = vector.extract_strided_slice %243 {offsets = [0, 0], sizes = [8, 64], strides = [1, 1]} : vector<8x128xf32> to vector<8x64xf32>
    %245 = arith.negf %244 : vector<8x64xf32>
    %246 = math.exp %245 : vector<8x64xf32>
    %cst_53 = arith.constant 1.000000e+00 : f32
    %247 = vector.broadcast %cst_53 : f32 to vector<8x64xf32>
    %248 = arith.addf %247, %246 : vector<8x64xf32>
    %249 = arith.divf %247, %248 : vector<8x64xf32>
    %250 = vector.extract_strided_slice %249 {offsets = [0, 0], sizes = [8, 32], strides = [1, 1]} : vector<8x64xf32> to vector<8x32xf32>
    %251 = vector.extract_strided_slice %249 {offsets = [0, 32], sizes = [8, 32], strides = [1, 1]} : vector<8x64xf32> to vector<8x32xf32>
    %252 = vector.extract_strided_slice %243 {offsets = [0, 64], sizes = [8, 32], strides = [1, 1]} : vector<8x128xf32> to vector<8x32xf32>
    %253 = vector.extract_strided_slice %243 {offsets = [0, 96], sizes = [8, 32], strides = [1, 1]} : vector<8x128xf32> to vector<8x32xf32>
    %254 = arith.mulf %250, %253 : vector<8x32xf32>
    %255 = arith.addf %252, %254 : vector<8x32xf32>
    %256 = math.tanh %255 : vector<8x32xf32>
    %cst_54 = arith.constant 1.000000e+00 : f32
    %257 = vector.broadcast %cst_54 : f32 to vector<8x32xf32>
    %258 = arith.subf %257, %251 : vector<8x32xf32>
    %259 = arith.mulf %258, %256 : vector<8x32xf32>
    %260 = arith.mulf %251, %162 : vector<8x32xf32>
    %261 = arith.addf %259, %260 : vector<8x32xf32>
    %262 = arith.select %217, %242, %261 : vector<8x32xi1>, vector<8x32xf32>
    %263 = tpu.concatenate %205, %242, %261 in 1 : vector<8x32xf32>, vector<8x32xf32>, vector<8x32xf32> -> vector<8x96xf32>
    %264 = arith.truncf %263 : vector<8x96xf32> to vector<8x96xbf16>
    %cst_55 = arith.constant dense<0.000000e+00> : vector<8x256xf32>
    %265 = tpu.matmul %264, %2, %cst_55 {dimension_numbers = #tpu.dot_dimension_numbers<[1], [0], [0], [1], [0, 0, 1, 1], [], []>} : vector<8x96xbf16>, vector<96x256xbf16>, vector<8x256xf32> -> vector<8x256xf32>
    %266 = arith.addf %265, %6 : vector<8x256xf32>
    %267 = vector.extract_strided_slice %266 {offsets = [0, 0], sizes = [8, 128], strides = [1, 1]} : vector<8x256xf32> to vector<8x128xf32>
    %268 = vector.extract_strided_slice %267 {offsets = [0, 0], sizes = [8, 64], strides = [1, 1]} : vector<8x128xf32> to vector<8x64xf32>
    %269 = arith.negf %268 : vector<8x64xf32>
    %270 = math.exp %269 : vector<8x64xf32>
    %cst_56 = arith.constant 1.000000e+00 : f32
    %271 = vector.broadcast %cst_56 : f32 to vector<8x64xf32>
    %272 = arith.addf %271, %270 : vector<8x64xf32>
    %273 = arith.divf %271, %272 : vector<8x64xf32>
    %274 = vector.extract_strided_slice %273 {offsets = [0, 0], sizes = [8, 32], strides = [1, 1]} : vector<8x64xf32> to vector<8x32xf32>
    %275 = vector.extract_strided_slice %273 {offsets = [0, 32], sizes = [8, 32], strides = [1, 1]} : vector<8x64xf32> to vector<8x32xf32>
    %276 = vector.extract_strided_slice %267 {offsets = [0, 64], sizes = [8, 32], strides = [1, 1]} : vector<8x128xf32> to vector<8x32xf32>
    %277 = vector.extract_strided_slice %267 {offsets = [0, 96], sizes = [8, 32], strides = [1, 1]} : vector<8x128xf32> to vector<8x32xf32>
    %278 = arith.mulf %274, %277 : vector<8x32xf32>
    %279 = arith.addf %276, %278 : vector<8x32xf32>
    %280 = math.tanh %279 : vector<8x32xf32>
    %cst_57 = arith.constant 1.000000e+00 : f32
    %281 = vector.broadcast %cst_57 : f32 to vector<8x32xf32>
    %282 = arith.subf %281, %275 : vector<8x32xf32>
    %283 = arith.mulf %282, %280 : vector<8x32xf32>
    %284 = arith.mulf %275, %205 : vector<8x32xf32>
    %285 = arith.addf %283, %284 : vector<8x32xf32>
    %286 = vector.extract_strided_slice %266 {offsets = [0, 128], sizes = [8, 128], strides = [1, 1]} : vector<8x256xf32> to vector<8x128xf32>
    %287 = vector.extract_strided_slice %286 {offsets = [0, 0], sizes = [8, 64], strides = [1, 1]} : vector<8x128xf32> to vector<8x64xf32>
    %288 = arith.negf %287 : vector<8x64xf32>
    %289 = math.exp %288 : vector<8x64xf32>
    %cst_58 = arith.constant 1.000000e+00 : f32
    %290 = vector.broadcast %cst_58 : f32 to vector<8x64xf32>
    %291 = arith.addf %290, %289 : vector<8x64xf32>
    %292 = arith.divf %290, %291 : vector<8x64xf32>
    %293 = vector.extract_strided_slice %292 {offsets = [0, 0], sizes = [8, 32], strides = [1, 1]} : vector<8x64xf32> to vector<8x32xf32>
    %294 = vector.extract_strided_slice %292 {offsets = [0, 32], sizes = [8, 32], strides = [1, 1]} : vector<8x64xf32> to vector<8x32xf32>
    %295 = vector.extract_strided_slice %286 {offsets = [0, 64], sizes = [8, 32], strides = [1, 1]} : vector<8x128xf32> to vector<8x32xf32>
    %296 = vector.extract_strided_slice %286 {offsets = [0, 96], sizes = [8, 32], strides = [1, 1]} : vector<8x128xf32> to vector<8x32xf32>
    %297 = arith.mulf %293, %296 : vector<8x32xf32>
    %298 = arith.addf %295, %297 : vector<8x32xf32>
    %299 = math.tanh %298 : vector<8x32xf32>
    %cst_59 = arith.constant 1.000000e+00 : f32
    %300 = vector.broadcast %cst_59 : f32 to vector<8x32xf32>
    %301 = arith.subf %300, %294 : vector<8x32xf32>
    %302 = arith.mulf %301, %299 : vector<8x32xf32>
    %303 = arith.mulf %294, %205 : vector<8x32xf32>
    %304 = arith.addf %302, %303 : vector<8x32xf32>
    %305 = arith.select %217, %285, %304 : vector<8x32xi1>, vector<8x32xf32>
    %306 = arith.select %217, %285, %304 : vector<8x32xi1>, vector<8x32xf32>
    %307 = arith.index_cast %c2_i32 : i32 to index
    %c0_60 = arith.constant 0 : index
    %c0_61 = arith.constant 0 : index
    %308 = vector.load %arg7[%307, %c0_60, %c0_61] : memref<4x8x32xf32, #tpu.memory_space<vmem>>, vector<1x8x32xf32>
    %309 = vector.shape_cast %308 : vector<1x8x32xf32> to vector<8x32xf32>
    %310 = vector.shape_cast %306 : vector<8x32xf32> to vector<1x8x32xf32>
    tpu.vector_store %arg7[%307, %c0_60, %c0_61], %310 {strides = array<i32>} : memref<4x8x32xf32, #tpu.memory_space<vmem>>, vector<1x8x32xf32>,
    %c3_i32 = arith.constant 3 : i32
    %311 = arith.index_cast %c3_i32 : i32 to index
    %c0_62 = arith.constant 0 : index
    %c0_63 = arith.constant 0 : index
    %312 = vector.load %arg2[%311, %c0_62, %c0_63] : memref<4x8x1xf32, #tpu.memory_space<vmem>>, vector<1x8x1xf32>
    %313 = vector.shape_cast %312 : vector<1x8x1xf32> to vector<8x1xf32>
    %314 = vector.shape_cast %313 : vector<8x1xf32> to vector<8x1xf32>
    %315 = vector.broadcast %314 : vector<8x1xf32> to vector<8x32xf32>
    %cst_64 = arith.constant 5.000000e-01 : f32
    %316 = vector.broadcast %cst_64 : f32 to vector<8x32xf32>
    %317 = arith.cmpf ogt, %315, %316 : vector<8x32xf32>
    %318 = arith.truncf %262 : vector<8x32xf32> to vector<8x32xbf16>
    %cst_65 = arith.constant dense<0.000000e+00> : vector<8x256xf32>
    %319 = tpu.matmul %318, %0, %cst_65 {dimension_numbers = #tpu.dot_dimension_numbers<[1], [0], [0], [1], [0, 0, 1, 1], [], []>} : vector<8x32xbf16>, vector<32x256xbf16>, vector<8x256xf32> -> vector<8x256xf32>
    %320 = arith.index_cast %c3_i32 : i32 to index
    %c0_66 = arith.constant 0 : index
    %c0_67 = arith.constant 0 : index
    %321 = vector.load %arg1[%320, %c0_66, %c0_67] : memref<4x8x256xf32, #tpu.memory_space<vmem>>, vector<1x8x256xf32>
    %322 = vector.shape_cast %321 : vector<1x8x256xf32> to vector<8x256xf32>
    %323 = arith.addf %322, %319 : vector<8x256xf32>
    %324 = vector.extract_strided_slice %323 {offsets = [0, 0], sizes = [8, 128], strides = [1, 1]} : vector<8x256xf32> to vector<8x128xf32>
    %325 = vector.extract_strided_slice %324 {offsets = [0, 0], sizes = [8, 64], strides = [1, 1]} : vector<8x128xf32> to vector<8x64xf32>
    %326 = arith.negf %325 : vector<8x64xf32>
    %327 = math.exp %326 : vector<8x64xf32>
    %cst_68 = arith.constant 1.000000e+00 : f32
    %328 = vector.broadcast %cst_68 : f32 to vector<8x64xf32>
    %329 = arith.addf %328, %327 : vector<8x64xf32>
    %330 = arith.divf %328, %329 : vector<8x64xf32>
    %331 = vector.extract_strided_slice %330 {offsets = [0, 0], sizes = [8, 32], strides = [1, 1]} : vector<8x64xf32> to vector<8x32xf32>
    %332 = vector.extract_strided_slice %330 {offsets = [0, 32], sizes = [8, 32], strides = [1, 1]} : vector<8x64xf32> to vector<8x32xf32>
    %333 = vector.extract_strided_slice %324 {offsets = [0, 64], sizes = [8, 32], strides = [1, 1]} : vector<8x128xf32> to vector<8x32xf32>
    %334 = vector.extract_strided_slice %324 {offsets = [0, 96], sizes = [8, 32], strides = [1, 1]} : vector<8x128xf32> to vector<8x32xf32>
    %335 = arith.mulf %331, %334 : vector<8x32xf32>
    %336 = arith.addf %333, %335 : vector<8x32xf32>
    %337 = math.tanh %336 : vector<8x32xf32>
    %cst_69 = arith.constant 1.000000e+00 : f32
    %338 = vector.broadcast %cst_69 : f32 to vector<8x32xf32>
    %339 = arith.subf %338, %332 : vector<8x32xf32>
    %340 = arith.mulf %339, %337 : vector<8x32xf32>
    %341 = arith.mulf %332, %262 : vector<8x32xf32>
    %342 = arith.addf %340, %341 : vector<8x32xf32>
    %343 = vector.extract_strided_slice %323 {offsets = [0, 128], sizes = [8, 128], strides = [1, 1]} : vector<8x256xf32> to vector<8x128xf32>
    %344 = vector.extract_strided_slice %343 {offsets = [0, 0], sizes = [8, 64], strides = [1, 1]} : vector<8x128xf32> to vector<8x64xf32>
    %345 = arith.negf %344 : vector<8x64xf32>
    %346 = math.exp %345 : vector<8x64xf32>
    %cst_70 = arith.constant 1.000000e+00 : f32
    %347 = vector.broadcast %cst_70 : f32 to vector<8x64xf32>
    %348 = arith.addf %347, %346 : vector<8x64xf32>
    %349 = arith.divf %347, %348 : vector<8x64xf32>
    %350 = vector.extract_strided_slice %349 {offsets = [0, 0], sizes = [8, 32], strides = [1, 1]} : vector<8x64xf32> to vector<8x32xf32>
    %351 = vector.extract_strided_slice %349 {offsets = [0, 32], sizes = [8, 32], strides = [1, 1]} : vector<8x64xf32> to vector<8x32xf32>
    %352 = vector.extract_strided_slice %343 {offsets = [0, 64], sizes = [8, 32], strides = [1, 1]} : vector<8x128xf32> to vector<8x32xf32>
    %353 = vector.extract_strided_slice %343 {offsets = [0, 96], sizes = [8, 32], strides = [1, 1]} : vector<8x128xf32> to vector<8x32xf32>
    %354 = arith.mulf %350, %353 : vector<8x32xf32>
    %355 = arith.addf %352, %354 : vector<8x32xf32>
    %356 = math.tanh %355 : vector<8x32xf32>
    %cst_71 = arith.constant 1.000000e+00 : f32
    %357 = vector.broadcast %cst_71 : f32 to vector<8x32xf32>
    %358 = arith.subf %357, %351 : vector<8x32xf32>
    %359 = arith.mulf %358, %356 : vector<8x32xf32>
    %360 = arith.mulf %351, %262 : vector<8x32xf32>
    %361 = arith.addf %359, %360 : vector<8x32xf32>
    %362 = arith.select %317, %342, %361 : vector<8x32xi1>, vector<8x32xf32>
    %363 = tpu.concatenate %305, %342, %361 in 1 : vector<8x32xf32>, vector<8x32xf32>, vector<8x32xf32> -> vector<8x96xf32>
    %364 = arith.truncf %363 : vector<8x96xf32> to vector<8x96xbf16>
    %cst_72 = arith.constant dense<0.000000e+00> : vector<8x256xf32>
    %365 = tpu.matmul %364, %2, %cst_72 {dimension_numbers = #tpu.dot_dimension_numbers<[1], [0], [0], [1], [0, 0, 1, 1], [], []>} : vector<8x96xbf16>, vector<96x256xbf16>, vector<8x256xf32> -> vector<8x256xf32>
    %366 = arith.addf %365, %6 : vector<8x256xf32>
    %367 = vector.extract_strided_slice %366 {offsets = [0, 0], sizes = [8, 128], strides = [1, 1]} : vector<8x256xf32> to vector<8x128xf32>
    %368 = vector.extract_strided_slice %367 {offsets = [0, 0], sizes = [8, 64], strides = [1, 1]} : vector<8x128xf32> to vector<8x64xf32>
    %369 = arith.negf %368 : vector<8x64xf32>
    %370 = math.exp %369 : vector<8x64xf32>
    %cst_73 = arith.constant 1.000000e+00 : f32
    %371 = vector.broadcast %cst_73 : f32 to vector<8x64xf32>
    %372 = arith.addf %371, %370 : vector<8x64xf32>
    %373 = arith.divf %371, %372 : vector<8x64xf32>
    %374 = vector.extract_strided_slice %373 {offsets = [0, 0], sizes = [8, 32], strides = [1, 1]} : vector<8x64xf32> to vector<8x32xf32>
    %375 = vector.extract_strided_slice %373 {offsets = [0, 32], sizes = [8, 32], strides = [1, 1]} : vector<8x64xf32> to vector<8x32xf32>
    %376 = vector.extract_strided_slice %367 {offsets = [0, 64], sizes = [8, 32], strides = [1, 1]} : vector<8x128xf32> to vector<8x32xf32>
    %377 = vector.extract_strided_slice %367 {offsets = [0, 96], sizes = [8, 32], strides = [1, 1]} : vector<8x128xf32> to vector<8x32xf32>
    %378 = arith.mulf %374, %377 : vector<8x32xf32>
    %379 = arith.addf %376, %378 : vector<8x32xf32>
    %380 = math.tanh %379 : vector<8x32xf32>
    %cst_74 = arith.constant 1.000000e+00 : f32
    %381 = vector.broadcast %cst_74 : f32 to vector<8x32xf32>
    %382 = arith.subf %381, %375 : vector<8x32xf32>
    %383 = arith.mulf %382, %380 : vector<8x32xf32>
    %384 = arith.mulf %375, %305 : vector<8x32xf32>
    %385 = arith.addf %383, %384 : vector<8x32xf32>
    %386 = vector.extract_strided_slice %366 {offsets = [0, 128], sizes = [8, 128], strides = [1, 1]} : vector<8x256xf32> to vector<8x128xf32>
    %387 = vector.extract_strided_slice %386 {offsets = [0, 0], sizes = [8, 64], strides = [1, 1]} : vector<8x128xf32> to vector<8x64xf32>
    %388 = arith.negf %387 : vector<8x64xf32>
    %389 = math.exp %388 : vector<8x64xf32>
    %cst_75 = arith.constant 1.000000e+00 : f32
    %390 = vector.broadcast %cst_75 : f32 to vector<8x64xf32>
    %391 = arith.addf %390, %389 : vector<8x64xf32>
    %392 = arith.divf %390, %391 : vector<8x64xf32>
    %393 = vector.extract_strided_slice %392 {offsets = [0, 0], sizes = [8, 32], strides = [1, 1]} : vector<8x64xf32> to vector<8x32xf32>
    %394 = vector.extract_strided_slice %392 {offsets = [0, 32], sizes = [8, 32], strides = [1, 1]} : vector<8x64xf32> to vector<8x32xf32>
    %395 = vector.extract_strided_slice %386 {offsets = [0, 64], sizes = [8, 32], strides = [1, 1]} : vector<8x128xf32> to vector<8x32xf32>
    %396 = vector.extract_strided_slice %386 {offsets = [0, 96], sizes = [8, 32], strides = [1, 1]} : vector<8x128xf32> to vector<8x32xf32>
    %397 = arith.mulf %393, %396 : vector<8x32xf32>
    %398 = arith.addf %395, %397 : vector<8x32xf32>
    %399 = math.tanh %398 : vector<8x32xf32>
    %cst_76 = arith.constant 1.000000e+00 : f32
    %400 = vector.broadcast %cst_76 : f32 to vector<8x32xf32>
    %401 = arith.subf %400, %394 : vector<8x32xf32>
    %402 = arith.mulf %401, %399 : vector<8x32xf32>
    %403 = arith.mulf %394, %305 : vector<8x32xf32>
    %404 = arith.addf %402, %403 : vector<8x32xf32>
    %405 = arith.select %317, %385, %404 : vector<8x32xi1>, vector<8x32xf32>
    %406 = arith.select %317, %385, %404 : vector<8x32xi1>, vector<8x32xf32>
    %407 = arith.index_cast %c3_i32 : i32 to index
    %c0_77 = arith.constant 0 : index
    %c0_78 = arith.constant 0 : index
    %408 = vector.load %arg7[%407, %c0_77, %c0_78] : memref<4x8x32xf32, #tpu.memory_space<vmem>>, vector<1x8x32xf32>
    %409 = vector.shape_cast %408 : vector<1x8x32xf32> to vector<8x32xf32>
    %410 = vector.shape_cast %406 : vector<8x32xf32> to vector<1x8x32xf32>
    tpu.vector_store %arg7[%407, %c0_77, %c0_78], %410 {strides = array<i32>} : memref<4x8x32xf32, #tpu.memory_space<vmem>>, vector<1x8x32xf32>,
    %c4_i32 = arith.constant 4 : i32
    %c0_79 = arith.constant 0 : index
    %c0_80 = arith.constant 0 : index
    %c0_81 = arith.constant 0 : index
    %411 = vector.load %arg8[%c0_79, %c0_80, %c0_81] : memref<2x8x32xf32, #tpu.memory_space<vmem>>, vector<1x8x32xf32>
    %412 = vector.shape_cast %411 : vector<1x8x32xf32> to vector<8x32xf32>
    %413 = vector.shape_cast %362 : vector<8x32xf32> to vector<1x8x32xf32>
    tpu.vector_store %arg8[%c0_79, %c0_80, %c0_81], %413 {strides = array<i32>} : memref<2x8x32xf32, #tpu.memory_space<vmem>>, vector<1x8x32xf32>,
    %c1_82 = arith.constant 1 : index
    %c0_83 = arith.constant 0 : index
    %c0_84 = arith.constant 0 : index
    %414 = vector.load %arg8[%c1_82, %c0_83, %c0_84] : memref<2x8x32xf32, #tpu.memory_space<vmem>>, vector<1x8x32xf32>
    %415 = vector.shape_cast %414 : vector<1x8x32xf32> to vector<8x32xf32>
    %416 = vector.shape_cast %405 : vector<8x32xf32> to vector<1x8x32xf32>
    tpu.vector_store %arg8[%c1_82, %c0_83, %c0_84], %416 {strides = array<i32>} : memref<2x8x32xf32, #tpu.memory_space<vmem>>, vector<1x8x32xf32>,
    return
  }
  func.func @transform_0(%arg0: i32) -> (i32, i32, i32) {
    %c0_i32 = arith.constant 0 : i32
    %c0_i32_0 = arith.constant 0 : i32
    %c0_i32_1 = arith.constant 0 : i32
    %c0_i32_2 = arith.constant 0 : i32
    return %c0_i32, %c0_i32_0, %c0_i32_1 : i32, i32, i32
  }
  func.func @transform_1(%arg0: i32) -> (i32, i32, i32) {
    %c0_i32 = arith.constant 0 : i32
    %c0_i32_0 = arith.constant 0 : i32
    %c0_i32_1 = arith.constant 0 : i32
    %c0_i32_2 = arith.constant 0 : i32
    return %c0_i32, %c0_i32_0, %c0_i32_1 : i32, i32, i32
  }
  func.func @transform_2(%arg0: i32) -> (i32, i32, i32) {
    %c0_i32 = arith.constant 0 : i32
    %c0_i32_0 = arith.constant 0 : i32
    %c0_i32_1 = arith.constant 0 : i32
    %c0_i32_2 = arith.constant 0 : i32
    return %c0_i32, %c0_i32_0, %c0_i32_1 : i32, i32, i32
  }
  func.func @transform_3(%arg0: i32) -> (i32, i32) {
    %c0_i32 = arith.constant 0 : i32
    %c0_i32_0 = arith.constant 0 : i32
    %c0_i32_1 = arith.constant 0 : i32
    return %c0_i32, %c0_i32_0 : i32, i32
  }
  func.func @transform_4(%arg0: i32) -> (i32, i32, i32) {
    %c0_i32 = arith.constant 0 : i32
    %c0_i32_0 = arith.constant 0 : i32
    %c0_i32_1 = arith.constant 0 : i32
    %c0_i32_2 = arith.constant 0 : i32
    return %c0_i32, %c0_i32_0, %c0_i32_1 : i32, i32, i32
  }
  func.func @transform_5(%arg0: i32) -> (i32, i32, i32) {
    %c0_i32 = arith.constant 0 : i32
    %c0_i32_0 = arith.constant 0 : i32
    %c0_i32_1 = arith.constant 0 : i32
    %c0_i32_2 = arith.constant 0 : i32
    return %c0_i32, %c0_i32_0, %c0_i32_1 : i32, i32, i32
  }
  func.func @transform_6(%arg0: i32) -> (i32, i32, i32) {
    %c0_i32 = arith.constant 0 : i32
    %c0_i32_0 = arith.constant 0 : i32
    %c0_i32_1 = arith.constant 0 : i32
    %c0_i32_2 = arith.constant 0 : i32
    return %c0_i32, %c0_i32_0, %c0_i32_1 : i32, i32, i32
  }
  func.func @transform_7(%arg0: i32) -> (i32, i32, i32) {
    %c0_i32 = arith.constant 0 : i32
    %c0_i32_0 = arith.constant 0 : i32
    %c0_i32_1 = arith.constant 0 : i32
    %c0_i32_2 = arith.constant 0 : i32
    return %c0_i32, %c0_i32_0, %c0_i32_1 : i32, i32, i32
  }
}

</mosaic_0001>

<llo_original>
// kernel: tpu_custom_call.1
$region0: #{tpu_custom_call.1}
  #allocation0 [shape = 'u32[]', space=smem, size = 0x4, offset = 0x4, fixed_abs, tag = 'smem constant byte address 0x4 - core index']
  #allocation1 [shape = 'u32[144,128]{1,0:T(1,128)}', space=vmem, size = 0x12000, scoped, tag = 'internal scratch']
  %s0 = inlined_call_operand.vmem [shape: f32[4,8,256], index: 0, kind: input, shape index: {}]
  %s1 = inlined_call_operand.vmem [shape: f32[4,8,1], index: 1, kind: input, shape index: {}]
  %s2 = inlined_call_operand.hbm [shape: f32[2,8,32], index: 2, kind: input, shape index: {}, may-alias: {2,7}]
  %s3 = inlined_call_operand.hbm [shape: bf16[32,256], index: 3, kind: input, shape index: {}]
  %s4 = inlined_call_operand.hbm [shape: bf16[1,96,256], index: 4, kind: input, shape index: {}]
  %s5 = inlined_call_operand.vmem [shape: f32[1,1,256], index: 5, kind: input, shape index: {}]
  %s6 = inlined_call_operand.hbm [shape: f32[4,8,32], index: 6, kind: output, shape index: {0}]
  %s7 = inlined_call_operand.hbm [shape: f32[2,8,32], index: 7, kind: output, shape index: {1}, may-alias: {2,7}]
  %8 = xla_tuple %s6, %s7
  %s9 = sld [smem:[#allocation0]]
  $region54: #{tpu_custom_call.1} parent=0
    _
  %s11 = ssub.s32 1, %s9
  %s12 = scalar_select 0, %s11, %s9
  $region1: #{tpu_custom_call.1} parent=0
    #allocation2 [shape = 'u8[8192]{0}', space=vmem, size = 0x2000, scoped, tag = 'input window, operand 2, single buffered']
    #allocation3 [shape = 's32[1]{0}', space=sflag, size = 0x4, scoped, tag = 'scoped memory for tpu_custom_call.1']
    #allocation4 [shape = 's32[1]{0}', space=sflag, size = 0x4, scoped, tag = 'scoped memory for tpu_custom_call.1']
    #allocation5 [shape = 'u8[16384]{0}', space=vmem, size = 0x4000, scoped, tag = 'input window, operand 3, single buffered']
    #allocation6 [shape = 's32[1]{0}', space=sflag, size = 0x4, scoped, tag = 'scoped memory for tpu_custom_call.1']
    #allocation7 [shape = 'u8[49152]{0}', space=vmem, size = 0xc000, scoped, tag = 'input window, operand 4, single buffered']
    #allocation8 [shape = 'u8[16384]{0}', space=vmem, size = 0x4000, scoped, tag = 'output window, operand 0, single buffered']
    #allocation9 [shape = 'u8[8192]{0}', space=vmem, size = 0x2000, scoped, tag = 'output window, operand 1, single buffered']
    #allocation10 [shape = 's32[1]{0}', space=sflag, size = 0x4, scoped, tag = 'scoped memory for tpu_custom_call.1']
    %13 = vsyncpa [#allocation3], 0
    %14 = vsyncpa [#allocation6], 0
    %15 = vsyncpa [#allocation4], 0
    %16 = vsyncpa [#allocation10], 0
    // Predicated region
    $region2: #{tpu_custom_call.1} parent=1 // pred_check
      _
    $region3: #{tpu_custom_call.1} parent=1 // pred_check_branch
      %18 = sbr.rel (0) target = $region5
    $region4: #{tpu_custom_call.1} parent=1 // pred_region
      _
    $region5: #{tpu_custom_call.1} parent=1 // pred_fallthru
      _
    // Predicated region
    $region6: #{tpu_custom_call.1} parent=1 // pred_check
      _
    $region7: #{tpu_custom_call.1} parent=1 // pred_check_branch
      %20 = sbr.rel (0) target = $region9
    $region8: #{tpu_custom_call.1} parent=1 // pred_region
      _
    $region9: #{tpu_custom_call.1} parent=1 // pred_fallthru
      _
    // Predicated region
    $region10: #{tpu_custom_call.1} parent=1 // pred_check
      _
    $region11: #{tpu_custom_call.1} parent=1 // pred_check_branch
      %22 = sbr.rel (0) target = $region13
    $region12: #{tpu_custom_call.1} parent=1 // pred_region
      %s24 = ssub.s32 256, 256
      %25 = vsyncadd [#allocation3], %s24
      %s26 = sshll.u32 [#allocation2], 4
      %s27 = int_to_ptr.vmem [resolvable:$true] %s26
      %32 = dma.hbm_to_vmem [thread:$0]  %s2, 256, %s27, [#allocation3], 128, 128, 8
    $region13: #{tpu_custom_call.1} parent=1 // pred_fallthru
      _
    // Predicated region
    $region14: #{tpu_custom_call.1} parent=1 // pred_check
      _
    $region15: #{tpu_custom_call.1} parent=1 // pred_check_branch
      %34 = sbr.rel (0) target = $region17
    $region16: #{tpu_custom_call.1} parent=1 // pred_region
      %s36 = ssub.s32 512, 512
      %37 = vsyncadd [#allocation6], %s36
      %s38 = sshll.u32 [#allocation5], 4
      %s39 = int_to_ptr.vmem [resolvable:$true] %s38
      %44 = dma.hbm_to_vmem [thread:$0]  %s3, 512, %s39, [#allocation6], 128, 128, 8
    $region17: #{tpu_custom_call.1} parent=1 // pred_fallthru
      _
    // Predicated region
    $region18: #{tpu_custom_call.1} parent=1 // pred_check
      _
    $region19: #{tpu_custom_call.1} parent=1 // pred_check_branch
      %46 = sbr.rel (0) target = $region21
    $region20: #{tpu_custom_call.1} parent=1 // pred_region
      %s48 = ssub.s32 1536, 1536
      %49 = vsyncadd [#allocation6], %s48
      %s50 = sshll.u32 [#allocation7], 4
      %s51 = int_to_ptr.vmem [resolvable:$true] %s50
      %56 = dma.hbm_to_vmem [thread:$0]  %s4, 1536, %s51, [#allocation6], 128, 128, 8
    $region21: #{tpu_custom_call.1} parent=1 // pred_fallthru
      _
    // Predicated region
    $region22: #{tpu_custom_call.1} parent=1 // pred_check
      _
    $region23: #{tpu_custom_call.1} parent=1 // pred_check_branch
      %58 = sbr.rel (0) target = $region25
    $region24: #{tpu_custom_call.1} parent=1 // pred_region
      _
    $region25: #{tpu_custom_call.1} parent=1 // pred_fallthru
      _
    // Predicated region
    $region26: #{tpu_custom_call.1} parent=1 // pred_check
      _
    $region27: #{tpu_custom_call.1} parent=1 // pred_check_branch
      %60 = sbr.rel (0) target = $region29
    $region28: #{tpu_custom_call.1} parent=1 // pred_region
      %61 = dma.done [#allocation3], 256
    $region29: #{tpu_custom_call.1} parent=1 // pred_fallthru
      _
    // Predicated region
    $region30: #{tpu_custom_call.1} parent=1 // pred_check
      _
    $region31: #{tpu_custom_call.1} parent=1 // pred_check_branch
      %63 = sbr.rel (0) target = $region33
    $region32: #{tpu_custom_call.1} parent=1 // pred_region
      %64 = dma.done [#allocation6], 512
    $region33: #{tpu_custom_call.1} parent=1 // pred_fallthru
      _
    // Predicated region
    $region34: #{tpu_custom_call.1} parent=1 // pred_check
      _
    $region35: #{tpu_custom_call.1} parent=1 // pred_check_branch
      %66 = sbr.rel (0) target = $region37
    $region36: #{tpu_custom_call.1} parent=1 // pred_region
      %67 = dma.done [#allocation6], 1536
    $region37: #{tpu_custom_call.1} parent=1 // pred_fallthru
      _
    %v69 = vld [vmem:[#allocation5] sm:$0xff]
    %v70 = vld [vmem:[#allocation5 + $0x8] sm:$0xff]
    %v71 = vld [vmem:[#allocation5 + $0x10] sm:$0xff]
    %v72 = vld [vmem:[#allocation5 + $0x18] sm:$0xff]
    %v73 = vld [vmem:[#allocation7] sm:$0xff]
    %v74 = vld [vmem:[#allocation7 + $0x8] sm:$0xff]
    %v75 = vld [vmem:[#allocation7 + $0x10] sm:$0xff]
    %v76 = vld [vmem:[#allocation7 + $0x18] sm:$0xff]
    %v77 = vld [vmem:[#allocation7 + $0x20] sm:$0xff]
    %v78 = vld [vmem:[#allocation7 + $0x28] sm:$0xff]
    %v79 = vld [vmem:[#allocation7 + $0x30] sm:$0xff]
    %v80 = vld [vmem:[#allocation7 + $0x38] sm:$0xff]
    %v81 = vld [vmem:[#allocation7 + $0x40] sm:$0xff]
    %v82 = vld [vmem:[#allocation7 + $0x48] sm:$0xff]
    %v83 = vld [vmem:[#allocation7 + $0x50] sm:$0xff]
    %v84 = vld [vmem:[#allocation7 + $0x58] sm:$0xff]
    %v85 = vld [vmem:[%s5] sm:$0x3]
    %v87 = vlaneseq
    %v88 = vshrl.u32 %v87, 7
    %v89 = vsub.s32 0, %v88
    %v90 = vrot.slane %v85, %v89
    %v91 = vlaneseq
    %v92 = vshrl.u32 %v91, 7
    %v93 = vsub.s32 1, %v92
    %v94 = vrot.slane %v85, %v93
    %v97 = vld [vmem:[#allocation2] sm:$0xff]
    %s98 = scalar_lea.vmem [#allocation2], 8
    %v99 = vld [vmem:[%s98] sm:$0xff]
    %v100 = vld [vmem:[%s1] sm:$0xff]
    %102 = vset.pattern.permute.xlu0 0
    %103 = vperm.xlu0 %102, %v100
    %v104 = vpop.permute.xlu0 %103
    %vm106 = vcmp.gt.f32.partialorder %v104, 0.5
    %v107 = vpack.c.bf16 %v97, %v97
    %v112 = vunpack.c.l.b16 %v69
    %v113 = vunpack.c.h.b16 %v69
    %v114 = vunpack.c.l.b16 %v70
    %v115 = vunpack.c.h.b16 %v70
    %v116 = vunpack.c.l.b16 %v71
    %v117 = vunpack.c.h.b16 %v71
    %v118 = vunpack.c.l.b16 %v72
    %v119 = vunpack.c.h.b16 %v72
    %v120 = vpack.c.b16 %v114, %v112
    %v121 = vpack.c.b16 %v115, %v113
    %v122 = vpack.c.b16 %v118, %v116
    %v123 = vpack.c.b16 %v119, %v117
    %vm128 = vcmask 261120
    %v130 = vsel %vm128, %v107, 0
    %132 = vmatprep.subr.bf16.mxu0 %v121
    %133 = vmatpush1.bf16.msra.mxu0 %v120
    %134 = vmatprep.subr.bf16.mxu0 %v123
    %135 = vmatpush1.bf16.msra.mxu0 %v122
    %136 = vmatprep.subr.bf16.mxu0 0
    %137 = vmatpush1.bf16.msra.mxu0 0
    %138 = vmatprep.subr.bf16.mxu0 0
    %139 = vmatpush1.bf16.msra.mxu0 0
    %140 = vmatprep.subr.bf16.mxu0 0
    %141 = vmatpush1.bf16.msra.mxu0 0
    %142 = vmatprep.subr.bf16.mxu0 0
    %143 = vmatpush1.bf16.msra.mxu0 0
    %144 = vmatprep.subr.bf16.mxu0 0
    %145 = vmatpush1.bf16.msra.mxu0 0
    %146 = vmatprep.subr.bf16.mxu0 0
    %147 = vmatpush1.bf16.msra.mxu0 0
    %148 = vmatprep.subr.bf16.mxu0 0
    %149 = vmatpush1.bf16.msra.mxu0 0
    %150 = vmatprep.subr.bf16.mxu0 0
    %151 = vmatpush1.bf16.msra.mxu0 0
    %152 = vmatprep.subr.bf16.mxu0 0
    %153 = vmatpush1.bf16.msra.mxu0 0
    %154 = vmatprep.subr.bf16.mxu0 0
    %155 = vmatpush1.bf16.msra.mxu0 0
    %156 = vmatprep.subr.bf16.mxu0 0
    %157 = vmatpush1.bf16.msra.mxu0 0
    %158 = vmatprep.subr.bf16.mxu0 0
    %159 = vmatpush1.bf16.msra.mxu0 0
    %160 = vmatprep.subr.bf16.mxu0 0
    %161 = vmatpush1.bf16.msra.mxu0 0
    %162 = vmatprep.subr.bf16.mxu0 0
    %163 = vmatpush1.bf16.msra.mxu0 0
    %164 = vmatprep.mubr.bf16.mxu0 0
    %165 = vmatmul.mubr.bf16.gmra.mrb[0].mxu0 %v130
    %v166 = vpop.f32.mrb[0].mxu0
    %v167 = vadd.f32 0.0, %v166
    %v168 = vpop.f32.mrb[0].mxu0
    %v169 = vadd.f32 0.0, %v168
    %v170 = vpop.f32.mrb[0].mxu0
    %v171 = vpop.f32.mrb[0].mxu0
    %172 = vdwg.mxu0
    %v173 = vld [vmem:[%s0] sm:$0xff]
    %v174 = vld [vmem:[%s0 + $0x8] sm:$0xff]
    %v175 = vadd.f32 %v173, %v167
    %v176 = vadd.f32 %v174, %v169
    %v177 = vxor.u32 %v175, 2147483648
    %v178 = vmul.f32 %v177, 1.442695
    %v179 = vpow.pop %v178
    %v180 = vadd.f32 %v179, 1.0
    %v181 = vrcp.pop %v180
    %v182 = vmul.f32 1.0, %v181
    %184 = vrot.lane.b32.xlu0 %v175, 32
    %v185 = vpop.permute.xlu0 %184
    %v187 = vmul.f32 %v182, %v185
    %189 = vrot.lane.b32.xlu0 %v187, 64
    %v190 = vpop.permute.xlu0 %189
    %v192 = vadd.f32 %v175, %v190
    %v193 = vtanh.pop %v192
    %v194 = vsub.f32 1.0, %v182
    %196 = vrot.lane.b32.xlu0 %v193, 96
    %v197 = vpop.permute.xlu0 %196
    %v199 = vmul.f32 %v194, %v197
    %201 = vrot.lane.b32.xlu0 %v97, 32
    %v202 = vpop.permute.xlu0 %201
    %v204 = vmul.f32 %v182, %v202
    %v205 = vadd.f32 %v199, %v204
    %v206 = vxor.u32 %v176, 2147483648
    %v207 = vmul.f32 %v206, 1.442695
    %v208 = vpow.pop %v207
    %v209 = vadd.f32 %v208, 1.0
    %v210 = vrcp.pop %v209
    %v211 = vmul.f32 1.0, %v210
    %213 = vrot.lane.b32.xlu0 %v176, 32
    %v214 = vpop.permute.xlu0 %213
    %v216 = vmul.f32 %v211, %v214
    %218 = vrot.lane.b32.xlu0 %v216, 64
    %v219 = vpop.permute.xlu0 %218
    %v221 = vadd.f32 %v176, %v219
    %v222 = vtanh.pop %v221
    %v223 = vsub.f32 1.0, %v211
    %225 = vrot.lane.b32.xlu0 %v222, 96
    %v226 = vpop.permute.xlu0 %225
    %v228 = vmul.f32 %v223, %v226
    %v229 = vmul.f32 %v211, %v202
    %v230 = vadd.f32 %v228, %v229
    %v231 = vsel %vm106, %v205, %v230
    %233 = vrot.lane.b32.xlu0 %v230, 32
    %v234 = vpop.permute.xlu0 %233
    %v236 = vsel %vm128, %v99, %v205
    %vm237 = vcmask 523264
    %v238 = vsel %vm237, %v236, %v234
    %v239 = vpack.c.bf16 %v238, %v238
    %v252 = vunpack.c.l.b16 %v73
    %v253 = vunpack.c.h.b16 %v73
    %v254 = vunpack.c.l.b16 %v74
    %v255 = vunpack.c.h.b16 %v74
    %v256 = vunpack.c.l.b16 %v75
    %v257 = vunpack.c.h.b16 %v75
    %v258 = vunpack.c.l.b16 %v76
    %v259 = vunpack.c.h.b16 %v76
    %v260 = vunpack.c.l.b16 %v77
    %v261 = vunpack.c.h.b16 %v77
    %v262 = vunpack.c.l.b16 %v78
    %v263 = vunpack.c.h.b16 %v78
    %v264 = vunpack.c.l.b16 %v79
    %v265 = vunpack.c.h.b16 %v79
    %v266 = vunpack.c.l.b16 %v80
    %v267 = vunpack.c.h.b16 %v80
    %v268 = vunpack.c.l.b16 %v81
    %v269 = vunpack.c.h.b16 %v81
    %v270 = vunpack.c.l.b16 %v82
    %v271 = vunpack.c.h.b16 %v82
    %v272 = vunpack.c.l.b16 %v83
    %v273 = vunpack.c.h.b16 %v83
    %v274 = vunpack.c.l.b16 %v84
    %v275 = vunpack.c.h.b16 %v84
    %v276 = vpack.c.b16 %v254, %v252
    %v277 = vpack.c.b16 %v255, %v253
    %v278 = vpack.c.b16 %v258, %v256
    %v279 = vpack.c.b16 %v259, %v257
    %v280 = vpack.c.b16 %v262, %v260
    %v281 = vpack.c.b16 %v263, %v261
    %v282 = vpack.c.b16 %v266, %v264
    %v283 = vpack.c.b16 %v267, %v265
    %v284 = vpack.c.b16 %v270, %v268
    %v285 = vpack.c.b16 %v271, %v269
    %v286 = vpack.c.b16 %v274, %v272
    %v287 = vpack.c.b16 %v275, %v273
    %vm300 = vcmask 785408
    %v302 = vsel %vm300, %v239, 0
    %304 = vmatprep.subr.bf16.mxu0 %v277
    %305 = vmatpush1.bf16.msra.mxu0 %v276
    %306 = vmatprep.subr.bf16.mxu0 %v279
    %307 = vmatpush1.bf16.msra.mxu0 %v278
    %308 = vmatprep.subr.bf16.mxu0 %v281
    %309 = vmatpush1.bf16.msra.mxu0 %v280
    %310 = vmatprep.subr.bf16.mxu0 %v283
    %311 = vmatpush1.bf16.msra.mxu0 %v282
    %312 = vmatprep.subr.bf16.mxu0 %v285
    %313 = vmatpush1.bf16.msra.mxu0 %v284
    %314 = vmatprep.subr.bf16.mxu0 %v287
    %315 = vmatpush1.bf16.msra.mxu0 %v286
    %316 = vmatprep.subr.bf16.mxu0 0
    %317 = vmatpush1.bf16.msra.mxu0 0
    %318 = vmatprep.subr.bf16.mxu0 0
    %319 = vmatpush1.bf16.msra.mxu0 0
    %320 = vmatprep.subr.bf16.mxu0 0
    %321 = vmatpush1.bf16.msra.mxu0 0
    %322 = vmatprep.subr.bf16.mxu0 0
    %323 = vmatpush1.bf16.msra.mxu0 0
    %324 = vmatprep.subr.bf16.mxu0 0
    %325 = vmatpush1.bf16.msra.mxu0 0
    %326 = vmatprep.subr.bf16.mxu0 0
    %327 = vmatpush1.bf16.msra.mxu0 0
    %328 = vmatprep.subr.bf16.mxu0 0
    %329 = vmatpush1.bf16.msra.mxu0 0
    %330 = vmatprep.subr.bf16.mxu0 0
    %331 = vmatpush1.bf16.msra.mxu0 0
    %332 = vmatprep.subr.bf16.mxu0 0
    %333 = vmatpush1.bf16.msra.mxu0 0
    %334 = vmatprep.subr.bf16.mxu0 0
    %335 = vmatpush1.bf16.msra.mxu0 0
    %336 = vmatprep.mubr.bf16.mxu0 0
    %337 = vmatmul.mubr.bf16.gmra.mrb[0].mxu0 %v302
    %v338 = vpop.f32.mrb[0].mxu0
    %v339 = vadd.f32 %v90, %v338
    %v340 = vpop.f32.mrb[0].mxu0
    %v341 = vadd.f32 %v94, %v340
    %v342 = vpop.f32.mrb[0].mxu0
    %v343 = vpop.f32.mrb[0].mxu0
    %344 = vdwg.mxu0
    %v345 = vxor.u32 %v339, 2147483648
    %v346 = vmul.f32 %v345, 1.442695
    %v347 = vpow.pop %v346
    %v348 = vadd.f32 %v347, 1.0
    %v349 = vrcp.pop %v348
    %v350 = vmul.f32 1.0, %v349
    %352 = vrot.lane.b32.xlu0 %v339, 32
    %v353 = vpop.permute.xlu0 %352
    %v355 = vmul.f32 %v350, %v353
    %357 = vrot.lane.b32.xlu0 %v355, 64
    %v358 = vpop.permute.xlu0 %357
    %v360 = vadd.f32 %v339, %v358
    %v361 = vtanh.pop %v360
    %v362 = vsub.f32 1.0, %v350
    %364 = vrot.lane.b32.xlu0 %v361, 96
    %v365 = vpop.permute.xlu0 %364
    %v367 = vmul.f32 %v362, %v365
    %369 = vrot.lane.b32.xlu0 %v99, 32
    %v370 = vpop.permute.xlu0 %369
    %v372 = vmul.f32 %v350, %v370
    %v373 = vadd.f32 %v367, %v372
    %v374 = vxor.u32 %v341, 2147483648
    %v375 = vmul.f32 %v374, 1.442695
    %v376 = vpow.pop %v375
    %v377 = vadd.f32 %v376, 1.0
    %v378 = vrcp.pop %v377
    %v379 = vmul.f32 1.0, %v378
    %381 = vrot.lane.b32.xlu0 %v341, 32
    %v382 = vpop.permute.xlu0 %381
    %v384 = vmul.f32 %v379, %v382
    %386 = vrot.lane.b32.xlu0 %v384, 64
    %v387 = vpop.permute.xlu0 %386
    %v389 = vadd.f32 %v341, %v387
    %v390 = vtanh.pop %v389
    %v391 = vsub.f32 1.0, %v379
    %393 = vrot.lane.b32.xlu0 %v390, 96
    %v394 = vpop.permute.xlu0 %393
    %v396 = vmul.f32 %v391, %v394
    %v397 = vmul.f32 %v379, %v370
    %v398 = vadd.f32 %v396, %v397
    %v399 = vsel %vm106, %v373, %v398
    %401 = vrot.lane.b32.xlu0 %v399, 96
    %v402 = vpop.permute.xlu0 %401
    %404 = vst.msk [vmem:[#allocation8] sm:$0xff] %vm128, %v402
    %s405 = scalar_lea.vmem %s1, 8
    %v406 = vld [vmem:[%s405] sm:$0xff]
    %408 = vset.pattern.permute.xlu0 0
    %409 = vperm.xlu0 %408, %v406
    %v410 = vpop.permute.xlu0 %409
    %vm412 = vcmp.gt.f32.partialorder %v410, 0.5
    %v413 = vpack.c.bf16 %v231, %v231
    %415 = vrot.lane.b32.xlu0 %v413, 96
    %v416 = vpop.permute.xlu0 %415
    %v418 = vsel %vm128, %v416, 0
    %420 = vmatprep.subr.bf16.mxu0 %v121
    %421 = vmatpush1.bf16.msra.mxu0 %v120
    %422 = vmatprep.subr.bf16.mxu0 %v123
    %423 = vmatpush1.bf16.msra.mxu0 %v122
    %424 = vmatprep.subr.bf16.mxu0 0
    %425 = vmatpush1.bf16.msra.mxu0 0
    %426 = vmatprep.subr.bf16.mxu0 0
    %427 = vmatpush1.bf16.msra.mxu0 0
    %428 = vmatprep.subr.bf16.mxu0 0
    %429 = vmatpush1.bf16.msra.mxu0 0
    %430 = vmatprep.subr.bf16.mxu0 0
    %431 = vmatpush1.bf16.msra.mxu0 0
    %432 = vmatprep.subr.bf16.mxu0 0
    %433 = vmatpush1.bf16.msra.mxu0 0
    %434 = vmatprep.subr.bf16.mxu0 0
    %435 = vmatpush1.bf16.msra.mxu0 0
    %436 = vmatprep.subr.bf16.mxu0 0
    %437 = vmatpush1.bf16.msra.mxu0 0
    %438 = vmatprep.subr.bf16.mxu0 0
    %439 = vmatpush1.bf16.msra.mxu0 0
    %440 = vmatprep.subr.bf16.mxu0 0
    %441 = vmatpush1.bf16.msra.mxu0 0
    %442 = vmatprep.subr.bf16.mxu0 0
    %443 = vmatpush1.bf16.msra.mxu0 0
    %444 = vmatprep.subr.bf16.mxu0 0
    %445 = vmatpush1.bf16.msra.mxu0 0
    %446 = vmatprep.subr.bf16.mxu0 0
    %447 = vmatpush1.bf16.msra.mxu0 0
    %448 = vmatprep.subr.bf16.mxu0 0
    %449 = vmatpush1.bf16.msra.mxu0 0
    %450 = vmatprep.subr.bf16.mxu0 0
    %451 = vmatpush1.bf16.msra.mxu0 0
    %452 = vmatprep.mubr.bf16.mxu0 0
    %453 = vmatmul.mubr.bf16.gmra.mrb[0].mxu0 %v418
    %v454 = vpop.f32.mrb[0].mxu0
    %v455 = vadd.f32 0.0, %v454
    %v456 = vpop.f32.mrb[0].mxu0
    %v457 = vadd.f32 0.0, %v456
    %v458 = vpop.f32.mrb[0].mxu0
    %v459 = vpop.f32.mrb[0].mxu0
    %460 = vdwg.mxu0
    %s461 = scalar_lea.vmem %s0, 16
    %v462 = vld [vmem:[%s461] sm:$0xff]
    %v463 = vld [vmem:[%s461 + $0x8] sm:$0xff]
    %v464 = vadd.f32 %v462, %v455
    %v465 = vadd.f32 %v463, %v457
    %v466 = vxor.u32 %v464, 2147483648
    %v467 = vmul.f32 %v466, 1.442695
    %v468 = vpow.pop %v467
    %v469 = vadd.f32 %v468, 1.0
    %v470 = vrcp.pop %v469
    %v471 = vmul.f32 1.0, %v470
    %473 = vrot.lane.b32.xlu0 %v464, 32
    %v474 = vpop.permute.xlu0 %473
    %v476 = vmul.f32 %v471, %v474
    %478 = vrot.lane.b32.xlu0 %v476, 64
    %v479 = vpop.permute.xlu0 %478
    %v481 = vadd.f32 %v464, %v479
    %v482 = vtanh.pop %v481
    %v483 = vsub.f32 1.0, %v471
    %485 = vrot.lane.b32.xlu0 %v482, 96
    %v486 = vpop.permute.xlu0 %485
    %v488 = vmul.f32 %v483, %v486
    %v489 = vmul.f32 %v471, %v231
    %v490 = vadd.f32 %v488, %v489
    %v491 = vxor.u32 %v465, 2147483648
    %v492 = vmul.f32 %v491, 1.442695
    %v493 = vpow.pop %v492
    %v494 = vadd.f32 %v493, 1.0
    %v495 = vrcp.pop %v494
    %v496 = vmul.f32 1.0, %v495
    %498 = vrot.lane.b32.xlu0 %v465, 32
    %v499 = vpop.permute.xlu0 %498
    %v501 = vmul.f32 %v496, %v499
    %503 = vrot.lane.b32.xlu0 %v501, 64
    %v504 = vpop.permute.xlu0 %503
    %v506 = vadd.f32 %v465, %v504
    %v507 = vtanh.pop %v506
    %v508 = vsub.f32 1.0, %v496
    %510 = vrot.lane.b32.xlu0 %v507, 96
    %v511 = vpop.permute.xlu0 %510
    %v513 = vmul.f32 %v508, %v511
    %v514 = vmul.f32 %v496, %v231
    %v515 = vadd.f32 %v513, %v514
    %v516 = vsel %vm412, %v490, %v515
    %518 = vrot.lane.b32.xlu0 %v515, 32
    %v519 = vpop.permute.xlu0 %518
    %v521 = vsel %vm128, %v402, %v490
    %v522 = vsel %vm237, %v521, %v519
    %v523 = vpack.c.bf16 %v522, %v522
    %v525 = vsel %vm300, %v523, 0
    %527 = vmatprep.subr.bf16.mxu0 %v277
    %528 = vmatpush1.bf16.msra.mxu0 %v276
    %529 = vmatprep.subr.bf16.mxu0 %v279
    %530 = vmatpush1.bf16.msra.mxu0 %v278
    %531 = vmatprep.subr.bf16.mxu0 %v281
    %532 = vmatpush1.bf16.msra.mxu0 %v280
    %533 = vmatprep.subr.bf16.mxu0 %v283
    %534 = vmatpush1.bf16.msra.mxu0 %v282
    %535 = vmatprep.subr.bf16.mxu0 %v285
    %536 = vmatpush1.bf16.msra.mxu0 %v284
    %537 = vmatprep.subr.bf16.mxu0 %v287
    %538 = vmatpush1.bf16.msra.mxu0 %v286
    %539 = vmatprep.subr.bf16.mxu0 0
    %540 = vmatpush1.bf16.msra.mxu0 0
    %541 = vmatprep.subr.bf16.mxu0 0
    %542 = vmatpush1.bf16.msra.mxu0 0
    %543 = vmatprep.subr.bf16.mxu0 0
    %544 = vmatpush1.bf16.msra.mxu0 0
    %545 = vmatprep.subr.bf16.mxu0 0
    %546 = vmatpush1.bf16.msra.mxu0 0
    %547 = vmatprep.subr.bf16.mxu0 0
    %548 = vmatpush1.bf16.msra.mxu0 0
    %549 = vmatprep.subr.bf16.mxu0 0
    %550 = vmatpush1.bf16.msra.mxu0 0
    %551 = vmatprep.subr.bf16.mxu0 0
    %552 = vmatpush1.bf16.msra.mxu0 0
    %553 = vmatprep.subr.bf16.mxu0 0
    %554 = vmatpush1.bf16.msra.mxu0 0
    %555 = vmatprep.subr.bf16.mxu0 0
    %556 = vmatpush1.bf16.msra.mxu0 0
    %557 = vmatprep.subr.bf16.mxu0 0
    %558 = vmatpush1.bf16.msra.mxu0 0
    %559 = vmatprep.mubr.bf16.mxu0 0
    %560 = vmatmul.mubr.bf16.gmra.mrb[0].mxu0 %v525
    %v561 = vpop.f32.mrb[0].mxu0
    %v562 = vadd.f32 %v90, %v561
    %v563 = vpop.f32.mrb[0].mxu0
    %v564 = vadd.f32 %v94, %v563
    %v565 = vpop.f32.mrb[0].mxu0
    %v566 = vpop.f32.mrb[0].mxu0
    %567 = vdwg.mxu0
    %v568 = vxor.u32 %v562, 2147483648
    %v569 = vmul.f32 %v568, 1.442695
    %v570 = vpow.pop %v569
    %v571 = vadd.f32 %v570, 1.0
    %v572 = vrcp.pop %v571
    %v573 = vmul.f32 1.0, %v572
    %575 = vrot.lane.b32.xlu0 %v562, 32
    %v576 = vpop.permute.xlu0 %575
    %v578 = vmul.f32 %v573, %v576
    %580 = vrot.lane.b32.xlu0 %v578, 64
    %v581 = vpop.permute.xlu0 %580
    %v583 = vadd.f32 %v562, %v581
    %v584 = vtanh.pop %v583
    %v585 = vsub.f32 1.0, %v573
    %587 = vrot.lane.b32.xlu0 %v584, 96
    %v588 = vpop.permute.xlu0 %587
    %v590 = vmul.f32 %v585, %v588
    %v591 = vmul.f32 %v573, %v399
    %v592 = vadd.f32 %v590, %v591
    %v593 = vxor.u32 %v564, 2147483648
    %v594 = vmul.f32 %v593, 1.442695
    %v595 = vpow.pop %v594
    %v596 = vadd.f32 %v595, 1.0
    %v597 = vrcp.pop %v596
    %v598 = vmul.f32 1.0, %v597
    %600 = vrot.lane.b32.xlu0 %v564, 32
    %v601 = vpop.permute.xlu0 %600
    %v603 = vmul.f32 %v598, %v601
    %605 = vrot.lane.b32.xlu0 %v603, 64
    %v606 = vpop.permute.xlu0 %605
    %v608 = vadd.f32 %v564, %v606
    %v609 = vtanh.pop %v608
    %v610 = vsub.f32 1.0, %v598
    %612 = vrot.lane.b32.xlu0 %v609, 96
    %v613 = vpop.permute.xlu0 %612
    %v615 = vmul.f32 %v610, %v613
    %v616 = vmul.f32 %v598, %v399
    %v617 = vadd.f32 %v615, %v616
    %v618 = vsel %vm412, %v592, %v617
    %620 = vrot.lane.b32.xlu0 %v618, 96
    %v621 = vpop.permute.xlu0 %620
    %s623 = scalar_lea.vmem [#allocation8], 8
    %624 = vst.msk [vmem:[%s623] sm:$0xff] %vm128, %v621
    %s625 = scalar_lea.vmem %s1, 16
    %v626 = vld [vmem:[%s625] sm:$0xff]
    %628 = vset.pattern.permute.xlu0 0
    %629 = vperm.xlu0 %628, %v626
    %v630 = vpop.permute.xlu0 %629
    %vm632 = vcmp.gt.f32.partialorder %v630, 0.5
    %v633 = vpack.c.bf16 %v516, %v516
    %635 = vrot.lane.b32.xlu0 %v633, 96
    %v636 = vpop.permute.xlu0 %635
    %v638 = vsel %vm128, %v636, 0
    %640 = vmatprep.subr.bf16.mxu0 %v121
    %641 = vmatpush1.bf16.msra.mxu0 %v120
    %642 = vmatprep.subr.bf16.mxu0 %v123
    %643 = vmatpush1.bf16.msra.mxu0 %v122
    %644 = vmatprep.subr.bf16.mxu0 0
    %645 = vmatpush1.bf16.msra.mxu0 0
    %646 = vmatprep.subr.bf16.mxu0 0
    %647 = vmatpush1.bf16.msra.mxu0 0
    %648 = vmatprep.subr.bf16.mxu0 0
    %649 = vmatpush1.bf16.msra.mxu0 0
    %650 = vmatprep.subr.bf16.mxu0 0
    %651 = vmatpush1.bf16.msra.mxu0 0
    %652 = vmatprep.subr.bf16.mxu0 0
    %653 = vmatpush1.bf16.msra.mxu0 0
    %654 = vmatprep.subr.bf16.mxu0 0
    %655 = vmatpush1.bf16.msra.mxu0 0
    %656 = vmatprep.subr.bf16.mxu0 0
    %657 = vmatpush1.bf16.msra.mxu0 0
    %658 = vmatprep.subr.bf16.mxu0 0
    %659 = vmatpush1.bf16.msra.mxu0 0
    %660 = vmatprep.subr.bf16.mxu0 0
    %661 = vmatpush1.bf16.msra.mxu0 0
    %662 = vmatprep.subr.bf16.mxu0 0
    %663 = vmatpush1.bf16.msra.mxu0 0
    %664 = vmatprep.subr.bf16.mxu0 0
    %665 = vmatpush1.bf16.msra.mxu0 0
    %666 = vmatprep.subr.bf16.mxu0 0
    %667 = vmatpush1.bf16.msra.mxu0 0
    %668 = vmatprep.subr.bf16.mxu0 0
    %669 = vmatpush1.bf16.msra.mxu0 0
    %670 = vmatprep.subr.bf16.mxu0 0
    %671 = vmatpush1.bf16.msra.mxu0 0
    %672 = vmatprep.mubr.bf16.mxu0 0
    %673 = vmatmul.mubr.bf16.gmra.mrb[0].mxu0 %v638
    %v674 = vpop.f32.mrb[0].mxu0
    %v675 = vadd.f32 0.0, %v674
    %v676 = vpop.f32.mrb[0].mxu0
    %v677 = vadd.f32 0.0, %v676
    %v678 = vpop.f32.mrb[0].mxu0
    %v679 = vpop.f32.mrb[0].mxu0
    %680 = vdwg.mxu0
    %s681 = scalar_lea.vmem %s0, 32
    %v682 = vld [vmem:[%s681] sm:$0xff]
    %v683 = vld [vmem:[%s681 + $0x8] sm:$0xff]
    %v684 = vadd.f32 %v682, %v675
    %v685 = vadd.f32 %v683, %v677
    %v686 = vxor.u32 %v684, 2147483648
    %v687 = vmul.f32 %v686, 1.442695
    %v688 = vpow.pop %v687
    %v689 = vadd.f32 %v688, 1.0
    %v690 = vrcp.pop %v689
    %v691 = vmul.f32 1.0, %v690
    %693 = vrot.lane.b32.xlu0 %v684, 32
    %v694 = vpop.permute.xlu0 %693
    %v696 = vmul.f32 %v691, %v694
    %698 = vrot.lane.b32.xlu0 %v696, 64
    %v699 = vpop.permute.xlu0 %698
    %v701 = vadd.f32 %v684, %v699
    %v702 = vtanh.pop %v701
    %v703 = vsub.f32 1.0, %v691
    %705 = vrot.lane.b32.xlu0 %v702, 96
    %v706 = vpop.permute.xlu0 %705
    %v708 = vmul.f32 %v703, %v706
    %v709 = vmul.f32 %v691, %v516
    %v710 = vadd.f32 %v708, %v709
    %v711 = vxor.u32 %v685, 2147483648
    %v712 = vmul.f32 %v711, 1.442695
    %v713 = vpow.pop %v712
    %v714 = vadd.f32 %v713, 1.0
    %v715 = vrcp.pop %v714
    %v716 = vmul.f32 1.0, %v715
    %718 = vrot.lane.b32.xlu0 %v685, 32
    %v719 = vpop.permute.xlu0 %718
    %v721 = vmul.f32 %v716, %v719
    %723 = vrot.lane.b32.xlu0 %v721, 64
    %v724 = vpop.permute.xlu0 %723
    %v726 = vadd.f32 %v685, %v724
    %v727 = vtanh.pop %v726
    %v728 = vsub.f32 1.0, %v716
    %730 = vrot.lane.b32.xlu0 %v727, 96
    %v731 = vpop.permute.xlu0 %730
    %v733 = vmul.f32 %v728, %v731
    %v734 = vmul.f32 %v716, %v516
    %v735 = vadd.f32 %v733, %v734
    %v736 = vsel %vm632, %v710, %v735
    %738 = vrot.lane.b32.xlu0 %v735, 32
    %v739 = vpop.permute.xlu0 %738
    %v741 = vsel %vm128, %v621, %v710
    %v742 = vsel %vm237, %v741, %v739
    %v743 = vpack.c.bf16 %v742, %v742
    %v745 = vsel %vm300, %v743, 0
    %747 = vmatprep.subr.bf16.mxu0 %v277
    %748 = vmatpush1.bf16.msra.mxu0 %v276
    %749 = vmatprep.subr.bf16.mxu0 %v279
    %750 = vmatpush1.bf16.msra.mxu0 %v278
    %751 = vmatprep.subr.bf16.mxu0 %v281
    %752 = vmatpush1.bf16.msra.mxu0 %v280
    %753 = vmatprep.subr.bf16.mxu0 %v283
    %754 = vmatpush1.bf16.msra.mxu0 %v282
    %755 = vmatprep.subr.bf16.mxu0 %v285
    %756 = vmatpush1.bf16.msra.mxu0 %v284
    %757 = vmatprep.subr.bf16.mxu0 %v287
    %758 = vmatpush1.bf16.msra.mxu0 %v286
    %759 = vmatprep.subr.bf16.mxu0 0
    %760 = vmatpush1.bf16.msra.mxu0 0
    %761 = vmatprep.subr.bf16.mxu0 0
    %762 = vmatpush1.bf16.msra.mxu0 0
    %763 = vmatprep.subr.bf16.mxu0 0
    %764 = vmatpush1.bf16.msra.mxu0 0
    %765 = vmatprep.subr.bf16.mxu0 0
    %766 = vmatpush1.bf16.msra.mxu0 0
    %767 = vmatprep.subr.bf16.mxu0 0
    %768 = vmatpush1.bf16.msra.mxu0 0
    %769 = vmatprep.subr.bf16.mxu0 0
    %770 = vmatpush1.bf16.msra.mxu0 0
    %771 = vmatprep.subr.bf16.mxu0 0
    %772 = vmatpush1.bf16.msra.mxu0 0
    %773 = vmatprep.subr.bf16.mxu0 0
    %774 = vmatpush1.bf16.msra.mxu0 0
    %775 = vmatprep.subr.bf16.mxu0 0
    %776 = vmatpush1.bf16.msra.mxu0 0
    %777 = vmatprep.subr.bf16.mxu0 0
    %778 = vmatpush1.bf16.msra.mxu0 0
    %779 = vmatprep.mubr.bf16.mxu0 0
    %780 = vmatmul.mubr.bf16.gmra.mrb[0].mxu0 %v745
    %v781 = vpop.f32.mrb[0].mxu0
    %v782 = vadd.f32 %v90, %v781
    %v783 = vpop.f32.mrb[0].mxu0
    %v784 = vadd.f32 %v94, %v783
    %v785 = vpop.f32.mrb[0].mxu0
    %v786 = vpop.f32.mrb[0].mxu0
    %787 = vdwg.mxu0
    %v788 = vxor.u32 %v782, 2147483648
    %v789 = vmul.f32 %v788, 1.442695
    %v790 = vpow.pop %v789
    %v791 = vadd.f32 %v790, 1.0
    %v792 = vrcp.pop %v791
    %v793 = vmul.f32 1.0, %v792
    %795 = vrot.lane.b32.xlu0 %v782, 32
    %v796 = vpop.permute.xlu0 %795
    %v798 = vmul.f32 %v793, %v796
    %800 = vrot.lane.b32.xlu0 %v798, 64
    %v801 = vpop.permute.xlu0 %800
    %v803 = vadd.f32 %v782, %v801
    %v804 = vtanh.pop %v803
    %v805 = vsub.f32 1.0, %v793
    %807 = vrot.lane.b32.xlu0 %v804, 96
    %v808 = vpop.permute.xlu0 %807
    %v810 = vmul.f32 %v805, %v808
    %v811 = vmul.f32 %v793, %v618
    %v812 = vadd.f32 %v810, %v811
    %v813 = vxor.u32 %v784, 2147483648
    %v814 = vmul.f32 %v813, 1.442695
    %v815 = vpow.pop %v814
    %v816 = vadd.f32 %v815, 1.0
    %v817 = vrcp.pop %v816
    %v818 = vmul.f32 1.0, %v817
    %820 = vrot.lane.b32.xlu0 %v784, 32
    %v821 = vpop.permute.xlu0 %820
    %v823 = vmul.f32 %v818, %v821
    %825 = vrot.lane.b32.xlu0 %v823, 64
    %v826 = vpop.permute.xlu0 %825
    %v828 = vadd.f32 %v784, %v826
    %v829 = vtanh.pop %v828
    %v830 = vsub.f32 1.0, %v818
    %832 = vrot.lane.b32.xlu0 %v829, 96
    %v833 = vpop.permute.xlu0 %832
    %v835 = vmul.f32 %v830, %v833
    %v836 = vmul.f32 %v818, %v618
    %v837 = vadd.f32 %v835, %v836
    %v838 = vsel %vm632, %v812, %v837
    %840 = vrot.lane.b32.xlu0 %v838, 96
    %v841 = vpop.permute.xlu0 %840
    %s843 = scalar_lea.vmem [#allocation8], 16
    %844 = vst.msk [vmem:[%s843] sm:$0xff] %vm128, %v841
    %s845 = scalar_lea.vmem %s1, 24
    %v846 = vld [vmem:[%s845] sm:$0xff]
    %848 = vset.pattern.permute.xlu0 0
    %849 = vperm.xlu0 %848, %v846
    %v850 = vpop.permute.xlu0 %849
    %vm852 = vcmp.gt.f32.partialorder %v850, 0.5
    %v853 = vpack.c.bf16 %v736, %v736
    %855 = vrot.lane.b32.xlu0 %v853, 96
    %v856 = vpop.permute.xlu0 %855
    %v858 = vsel %vm128, %v856, 0
    %860 = vmatprep.subr.bf16.mxu0 %v121
    %861 = vmatpush1.bf16.msra.mxu0 %v120
    %862 = vmatprep.subr.bf16.mxu0 %v123
    %863 = vmatpush1.bf16.msra.mxu0 %v122
    %864 = vmatprep.subr.bf16.mxu0 0
    %865 = vmatpush1.bf16.msra.mxu0 0
    %866 = vmatprep.subr.bf16.mxu0 0
    %867 = vmatpush1.bf16.msra.mxu0 0
    %868 = vmatprep.subr.bf16.mxu0 0
    %869 = vmatpush1.bf16.msra.mxu0 0
    %870 = vmatprep.subr.bf16.mxu0 0
    %871 = vmatpush1.bf16.msra.mxu0 0
    %872 = vmatprep.subr.bf16.mxu0 0
    %873 = vmatpush1.bf16.msra.mxu0 0
    %874 = vmatprep.subr.bf16.mxu0 0
    %875 = vmatpush1.bf16.msra.mxu0 0
    %876 = vmatprep.subr.bf16.mxu0 0
    %877 = vmatpush1.bf16.msra.mxu0 0
    %878 = vmatprep.subr.bf16.mxu0 0
    %879 = vmatpush1.bf16.msra.mxu0 0
    %880 = vmatprep.subr.bf16.mxu0 0
    %881 = vmatpush1.bf16.msra.mxu0 0
    %882 = vmatprep.subr.bf16.mxu0 0
    %883 = vmatpush1.bf16.msra.mxu0 0
    %884 = vmatprep.subr.bf16.mxu0 0
    %885 = vmatpush1.bf16.msra.mxu0 0
    %886 = vmatprep.subr.bf16.mxu0 0
    %887 = vmatpush1.bf16.msra.mxu0 0
    %888 = vmatprep.subr.bf16.mxu0 0
    %889 = vmatpush1.bf16.msra.mxu0 0
    %890 = vmatprep.subr.bf16.mxu0 0
    %891 = vmatpush1.bf16.msra.mxu0 0
    %892 = vmatprep.mubr.bf16.mxu0 0
    %893 = vmatmul.mubr.bf16.gmra.mrb[0].mxu0 %v858
    %v894 = vpop.f32.mrb[0].mxu0
    %v895 = vadd.f32 0.0, %v894
    %v896 = vpop.f32.mrb[0].mxu0
    %v897 = vadd.f32 0.0, %v896
    %v898 = vpop.f32.mrb[0].mxu0
    %v899 = vpop.f32.mrb[0].mxu0
    %900 = vdwg.mxu0
    %s901 = scalar_lea.vmem %s0, 48
    %v902 = vld [vmem:[%s901] sm:$0xff]
    %v903 = vld [vmem:[%s901 + $0x8] sm:$0xff]
    %v904 = vadd.f32 %v902, %v895
    %v905 = vadd.f32 %v903, %v897
    %v906 = vxor.u32 %v904, 2147483648
    %v907 = vmul.f32 %v906, 1.442695
    %v908 = vpow.pop %v907
    %v909 = vadd.f32 %v908, 1.0
    %v910 = vrcp.pop %v909
    %v911 = vmul.f32 1.0, %v910
    %913 = vrot.lane.b32.xlu0 %v904, 32
    %v914 = vpop.permute.xlu0 %913
    %v916 = vmul.f32 %v911, %v914
    %918 = vrot.lane.b32.xlu0 %v916, 64
    %v919 = vpop.permute.xlu0 %918
    %v921 = vadd.f32 %v904, %v919
    %v922 = vtanh.pop %v921
    %v923 = vsub.f32 1.0, %v911
    %925 = vrot.lane.b32.xlu0 %v922, 96
    %v926 = vpop.permute.xlu0 %925
    %v928 = vmul.f32 %v923, %v926
    %v929 = vmul.f32 %v911, %v736
    %v930 = vadd.f32 %v928, %v929
    %v931 = vxor.u32 %v905, 2147483648
    %v932 = vmul.f32 %v931, 1.442695
    %v933 = vpow.pop %v932
    %v934 = vadd.f32 %v933, 1.0
    %v935 = vrcp.pop %v934
    %v936 = vmul.f32 1.0, %v935
    %938 = vrot.lane.b32.xlu0 %v905, 32
    %v939 = vpop.permute.xlu0 %938
    %v941 = vmul.f32 %v936, %v939
    %943 = vrot.lane.b32.xlu0 %v941, 64
    %v944 = vpop.permute.xlu0 %943
    %v946 = vadd.f32 %v905, %v944
    %v947 = vtanh.pop %v946
    %v948 = vsub.f32 1.0, %v936
    %950 = vrot.lane.b32.xlu0 %v947, 96
    %v951 = vpop.permute.xlu0 %950
    %v953 = vmul.f32 %v948, %v951
    %v954 = vmul.f32 %v936, %v736
    %v955 = vadd.f32 %v953, %v954
    %v956 = vsel %vm852, %v930, %v955
    %958 = vrot.lane.b32.xlu0 %v955, 32
    %v959 = vpop.permute.xlu0 %958
    %v961 = vsel %vm128, %v841, %v930
    %v962 = vsel %vm237, %v961, %v959
    %v963 = vpack.c.bf16 %v962, %v962
    %v965 = vsel %vm300, %v963, 0
    %967 = vmatprep.subr.bf16.mxu0 %v277
    %968 = vmatpush1.bf16.msra.mxu0 %v276
    %969 = vmatprep.subr.bf16.mxu0 %v279
    %970 = vmatpush1.bf16.msra.mxu0 %v278
    %971 = vmatprep.subr.bf16.mxu0 %v281
    %972 = vmatpush1.bf16.msra.mxu0 %v280
    %973 = vmatprep.subr.bf16.mxu0 %v283
    %974 = vmatpush1.bf16.msra.mxu0 %v282
    %975 = vmatprep.subr.bf16.mxu0 %v285
    %976 = vmatpush1.bf16.msra.mxu0 %v284
    %977 = vmatprep.subr.bf16.mxu0 %v287
    %978 = vmatpush1.bf16.msra.mxu0 %v286
    %979 = vmatprep.subr.bf16.mxu0 0
    %980 = vmatpush1.bf16.msra.mxu0 0
    %981 = vmatprep.subr.bf16.mxu0 0
    %982 = vmatpush1.bf16.msra.mxu0 0
    %983 = vmatprep.subr.bf16.mxu0 0
    %984 = vmatpush1.bf16.msra.mxu0 0
    %985 = vmatprep.subr.bf16.mxu0 0
    %986 = vmatpush1.bf16.msra.mxu0 0
    %987 = vmatprep.subr.bf16.mxu0 0
    %988 = vmatpush1.bf16.msra.mxu0 0
    %989 = vmatprep.subr.bf16.mxu0 0
    %990 = vmatpush1.bf16.msra.mxu0 0
    %991 = vmatprep.subr.bf16.mxu0 0
    %992 = vmatpush1.bf16.msra.mxu0 0
    %993 = vmatprep.subr.bf16.mxu0 0
    %994 = vmatpush1.bf16.msra.mxu0 0
    %995 = vmatprep.subr.bf16.mxu0 0
    %996 = vmatpush1.bf16.msra.mxu0 0
    %997 = vmatprep.subr.bf16.mxu0 0
    %998 = vmatpush1.bf16.msra.mxu0 0
    %999 = vmatprep.mubr.bf16.mxu0 0
    %1000 = vmatmul.mubr.bf16.gmra.mrb[0].mxu0 %v965
    %v1001 = vpop.f32.mrb[0].mxu0
    %v1002 = vadd.f32 %v90, %v1001
    %v1003 = vpop.f32.mrb[0].mxu0
    %v1004 = vadd.f32 %v94, %v1003
    %v1005 = vpop.f32.mrb[0].mxu0
    %v1006 = vpop.f32.mrb[0].mxu0
    %1007 = vdwg.mxu0
    %v1008 = vxor.u32 %v1002, 2147483648
    %v1009 = vmul.f32 %v1008, 1.442695
    %v1010 = vpow.pop %v1009
    %v1011 = vadd.f32 %v1010, 1.0
    %v1012 = vrcp.pop %v1011
    %v1013 = vmul.f32 1.0, %v1012
    %1015 = vrot.lane.b32.xlu0 %v1002, 32
    %v1016 = vpop.permute.xlu0 %1015
    %v1018 = vmul.f32 %v1013, %v1016
    %1020 = vrot.lane.b32.xlu0 %v1018, 64
    %v1021 = vpop.permute.xlu0 %1020
    %v1023 = vadd.f32 %v1002, %v1021
    %v1024 = vtanh.pop %v1023
    %v1025 = vsub.f32 1.0, %v1013
    %1027 = vrot.lane.b32.xlu0 %v1024, 96
    %v1028 = vpop.permute.xlu0 %1027
    %v1030 = vmul.f32 %v1025, %v1028
    %v1031 = vmul.f32 %v1013, %v838
    %v1032 = vadd.f32 %v1030, %v1031
    %v1033 = vxor.u32 %v1004, 2147483648
    %v1034 = vmul.f32 %v1033, 1.442695
    %v1035 = vpow.pop %v1034
    %v1036 = vadd.f32 %v1035, 1.0
    %v1037 = vrcp.pop %v1036
    %v1038 = vmul.f32 1.0, %v1037
    %1040 = vrot.lane.b32.xlu0 %v1004, 32
    %v1041 = vpop.permute.xlu0 %1040
    %v1043 = vmul.f32 %v1038, %v1041
    %1045 = vrot.lane.b32.xlu0 %v1043, 64
    %v1046 = vpop.permute.xlu0 %1045
    %v1048 = vadd.f32 %v1004, %v1046
    %v1049 = vtanh.pop %v1048
    %v1050 = vsub.f32 1.0, %v1038
    %1052 = vrot.lane.b32.xlu0 %v1049, 96
    %v1053 = vpop.permute.xlu0 %1052
    %v1055 = vmul.f32 %v1050, %v1053
    %v1056 = vmul.f32 %v1038, %v838
    %v1057 = vadd.f32 %v1055, %v1056
    %v1058 = vsel %vm852, %v1032, %v1057
    %1060 = vrot.lane.b32.xlu0 %v1058, 96
    %v1061 = vpop.permute.xlu0 %1060
    %s1063 = scalar_lea.vmem [#allocation8], 24
    %1064 = vst.msk [vmem:[%s1063] sm:$0xff] %vm128, %v1061
    %1066 = vrot.lane.b32.xlu0 %v956, 96
    %v1067 = vpop.permute.xlu0 %1066
    %1069 = vst.msk [vmem:[#allocation9] sm:$0xff] %vm128, %v1067
    %s1070 = scalar_lea.vmem [#allocation9], 8
    %1071 = vst.msk [vmem:[%s1070] sm:$0xff] %vm128, %v1061
    // Predicated region
    $region38: #{tpu_custom_call.1} parent=1 // pred_check
      _
    $region39: #{tpu_custom_call.1} parent=1 // pred_check_branch
      %1073 = sbr.rel (0) target = $region41
    $region40: #{tpu_custom_call.1} parent=1 // pred_region
      %s1075 = ssub.s32 512, 512
      %1076 = vsyncadd [#allocation4], %s1075
      %s1077 = sshll.u32 [#allocation8], 4
      %s1078 = int_to_ptr.vmem [resolvable:$true] %s1077
      %1083 = dma.vmem_to_hbm [thread:$0]  %s1078, 512, %s6, [#allocation4], 128, 128, 8
    $region41: #{tpu_custom_call.1} parent=1 // pred_fallthru
      _
    // Predicated region
    $region42: #{tpu_custom_call.1} parent=1 // pred_check
      _
    $region43: #{tpu_custom_call.1} parent=1 // pred_check_branch
      %1085 = sbr.rel (0) target = $region45
    $region44: #{tpu_custom_call.1} parent=1 // pred_region
      %s1087 = ssub.s32 256, 256
      %1088 = vsyncadd [#allocation10], %s1087
      %s1089 = sshll.u32 [#allocation9], 4
      %s1090 = int_to_ptr.vmem [resolvable:$true] %s1089
      %1095 = dma.vmem_to_hbm [thread:$0]  %s1090, 256, %s7, [#allocation10], 128, 128, 8
    $region45: #{tpu_custom_call.1} parent=1 // pred_fallthru
      _
    // Predicated region
    $region46: #{tpu_custom_call.1} parent=1 // pred_check
      _
    $region47: #{tpu_custom_call.1} parent=1 // pred_check_branch
      %1097 = sbr.rel (0) target = $region49
    $region48: #{tpu_custom_call.1} parent=1 // pred_region
      %1098 = dma.done [#allocation4], 512
    $region49: #{tpu_custom_call.1} parent=1 // pred_fallthru
      _
    // Predicated region
    $region50: #{tpu_custom_call.1} parent=1 // pred_check
      _
    $region51: #{tpu_custom_call.1} parent=1 // pred_check_branch
      %1100 = sbr.rel (0) target = $region53
    $region52: #{tpu_custom_call.1} parent=1 // pred_region
      %1101 = dma.done [#allocation10], 256
    $region53: #{tpu_custom_call.1} parent=1 // pred_fallthru
      _
    %1102 = vsyncpa [#allocation3], 1
    %1103 = vsyncpa [#allocation6], 1
    %1104 = vsyncpa [#allocation4], 1
    %1105 = vsyncpa [#allocation10], 1

</llo_original>
